<compile_context>
chip_gen: v7x
topology: tpu7x:2x2x1
jax: 0.10.0
libtpu: 0.0.40
codegen_flags: <defaults>
</compile_context>

<pallas_src>
import numpy as np
import jax
import jax.numpy as jnp
from jax.experimental import pallas as pl
from jax.experimental.pallas import tpu as pltpu


# ---------------------------------------------------------------------------
# Packing (host-side glue, mirrors Quant3Linear.pack bit layout exactly)
# ---------------------------------------------------------------------------
def pack3(intweight_np):
    """intweight_np: (K, N) ints in [0, 8). Returns (K//32*3, N) int32 packed.

    NOTE: high bits of values shifted past bit 31 are intentionally dropped by the
    0xFFFFFFFF mask -- they are re-stored in the next packed row (GPTQ layout).
    """
    K, N = intweight_np.shape
    assert K % 32 == 0
    iw = intweight_np.astype(np.uint64)
    q = np.zeros((K // 32 * 3, N), dtype=np.uint64)
    i = 0
    row = 0
    while row < q.shape[0]:
        for j in range(i, i + 10):
            q[row] |= iw[j] << (3 * (j - i))
        i += 10
        q[row] |= iw[i] << 30
        row += 1
        q[row] |= (iw[i] >> 2) & 1
        i += 1
        for j in range(i, i + 10):
            q[row] |= iw[j] << (3 * (j - i) + 1)
        i += 10
        q[row] |= iw[i] << 31
        row += 1
        q[row] |= (iw[i] >> 1) & 3
        i += 1
        for j in range(i, i + 10):
            q[row] |= iw[j] << (3 * (j - i) + 2)
        i += 10
        row += 1
    q = (q & np.uint64(0xFFFFFFFF)).astype(np.uint32)
    return q.view(np.int32)


def repack_bitplanes(qweight_np):
    """(3G, N) GPTQ-packed int32 -> three bit-plane-major (G, N) int32 arrays.

    One-time host cost; lets the kernel DMA contiguous (G, tn) tiles per plane.
    """
    q = np.asarray(qweight_np)
    G = q.shape[0] // 3
    q = q.reshape(G, 3, q.shape[1])
    return (np.ascontiguousarray(q[:, 0, :]),
            np.ascontiguousarray(q[:, 1, :]),
            np.ascontiguousarray(q[:, 2, :]))


# ---------------------------------------------------------------------------
# Sub-field table: the 34 bit-fields that make up the 32 weights of one group.
# Each entry: (plane, op, operand, source position in the 32-group, x multiplier)
#   op == "and": field = plane & operand  (value is v * 2**shift; x is pre-multiplied
#                                          by 2**-shift so the product is v * x)
#   op == "shr": field = plane >> operand (logical; fields touching bit 31)
# The kernel writes the fields to the scratch in this exact order, and the wrapper
# builds the matching x vector from the (position, multiplier) columns.
# ---------------------------------------------------------------------------
_SUBFIELDS = tuple(
    [(0, "and", 7 << (3 * j), j, 2.0 ** (-3 * j)) for j in range(10)]
    + [(0, "shr", 30, 10, 1.0),          # low 2 bits of position 10 (bits 30..31)
       (1, "and", 1, 10, 4.0)]           # high bit of position 10   (plane1 bit 0)
    + [(1, "and", 7 << (3 * j + 1), 11 + j, 2.0 ** -(3 * j + 1)) for j in range(10)]
    + [(1, "shr", 31, 21, 1.0),          # low bit of position 21    (plane1 bit 31)
       (2, "and", 3, 21, 2.0)]           # high 2 bits of position 21 (plane2 bits 0..1)
    + [(2, "and", 7 << (3 * j + 2), 22 + j, 2.0 ** -(3 * j + 2)) for j in range(9)]
    + [(2, "shr", 29, 31, 1.0)]          # position 31 (plane2 bits 29..31)
)
assert len(_SUBFIELDS) == 34
_NSUB = len(_SUBFIELDS)


def _pick_gs(G, tn):
    """Rows of the bit planes processed per unpack step.

    Bounded so per-sub-field intermediates stay ~16 vregs (gs * tn * 4B <= 64 KiB),
    preferring multiples of 16 so bf16 scratch stores are tile-aligned.
    """
    for gs in (32, 16, 8, 4, 2, 1):
        if G % gs == 0 and gs * tn * 4 <= 64 * 1024:
            return gs
    return 1


# ---------------------------------------------------------------------------
# Pallas kernel: fused vectorized 3-bit unpack (into bf16 scratch) + matvec
# ---------------------------------------------------------------------------
def _make_kernel(gs, nslab):
    def kernel(xs_ref, q0_ref, q1_ref, q2_ref, vec_ref, o_ref, w_scr):
        tn = o_ref.shape[-1]
        plane_refs = (q0_ref, q1_ref, q2_ref)
        acc = jnp.zeros((1, tn), jnp.float32)
        # Static slab loop; each slab unpacks gs groups (34 sub-fields) into the
        # bf16 scratch and contracts them with one (1, 34*gs) pre-scaled x row.
        for s in range(nslab):
            r0 = s * gs
            for idx, (plane, op, operand, _pos, _mul) in enumerate(_SUBFIELDS):
                # Re-read the plane slab per use (never hoist a G-sized tile).
                w = pltpu.bitcast(plane_refs[plane][r0:r0 + gs, :], jnp.uint32)
                if op == "and":
                    w = w & jnp.uint32(operand)       # value = v << shift (exact in bf16)
                else:
                    w = w >> jnp.uint32(operand)      # logical shift for bit-31 fields
                w = pltpu.bitcast(w, jnp.int32).astype(jnp.float32).astype(jnp.bfloat16)
                w_scr[idx * gs:(idx + 1) * gs, :] = w
            acc = acc + jnp.dot(xs_ref[s:s + 1, :], w_scr[...],
                                preferred_element_type=jnp.float32)
        # y = (bias - zeros*sum(x)) + scales * (q . x)
        o_ref[...] = vec_ref[1:2, :] + vec_ref[0:1, :] * acc

    return kernel


def quant3linear_forward(x, q0, q1, q2, scales, zeros, bias, *, tn=1024):
    """Single-token forward matching Quant3Linear.forward (faster=False path).

    q0/q1/q2 are the bit-plane-major (G, N) planes from `repack_bitplanes`.
    zeros is assumed to already equal zero_point * scales (as the torch module stores it).
    """
    if x.shape[-1] != x.size:
        raise ValueError("Only supports a single token currently.")
    K = x.shape[-1]
    N = int(bias.reshape(-1).shape[0])
    assert K % 32 == 0
    assert N % 128 == 0, "outfeatures must be a multiple of 128 for the TPU kernel"
    G = K // 32
    assert q0.shape == (G, N) and q1.shape == (G, N) and q2.shape == (G, N)

    # ---- choose the N tile --------------------------------------------------
    tn = max(128, min(tn, N))
    tn = (tn // 128) * 128
    while tn > 128 and N % tn != 0:
        tn -= 128
    # Give the two v7x TensorCores at least one block each (harmless elsewhere).
    if N // tn < 2 and tn % 256 == 0:
        tn //= 2

    # VMEM budget (v7x has only 64 MiB/TC): cap tn so double-buffered planes +
    # scratch stay well under the scoped limit. (Alternative to a K grid axis.)
    def _vmem_bytes(tn_):
        gs_ = _pick_gs(G, tn_)
        nslab_ = G // gs_
        return (2 * (3 * G * tn_ * 4                # double-buffered bit planes
                     + nslab_ * _NSUB * gs_ * 2     # x_slab
                     + 2 * tn_ * 4 + tn_ * 4)       # scales/eps vectors + out
                + _NSUB * gs_ * tn_ * 2)            # unpack scratch
    while _vmem_bytes(tn) > 36 * 2 ** 20 and tn % 256 == 0:
        tn //= 2
    assert N % tn == 0 and tn % 128 == 0

    gs = _pick_gs(G, tn)
    nslab = G // gs

    # ---- host-side prep (tiny, one token) -----------------------------------
    x32 = x.reshape(-1).astype(jnp.float32)
    xg = x32.reshape(G, 32)                                   # xg[g, p] = x[32g + p]
    # x_slab[s, r*gs + gg] = x[32*(s*gs+gg) + pos_r] * mul_r, cast to bf16
    cols = jnp.stack([xg[:, p] * m for (_, _, _, p, m) in _SUBFIELDS], axis=0)  # (34, G)
    x_slab = (cols.reshape(_NSUB, nslab, gs)
              .transpose(1, 0, 2)
              .reshape(nslab, _NSUB * gs)
              .astype(jnp.bfloat16))

    scales1 = scales.reshape(-1).astype(jnp.float32)
    zeros1 = zeros.reshape(-1).astype(jnp.float32)
    bias1 = bias.reshape(-1).astype(jnp.float32)
    eps = bias1 - zeros1 * jnp.sum(x32)                       # epilogue precompute
    vec = jnp.stack([scales1, eps], axis=0)                   # (2, N)

    grid = (N // tn,)
    out = pl.pallas_call(
        _make_kernel(gs, nslab),
        out_shape=jax.ShapeDtypeStruct((1, N), jnp.float32),
        grid_spec=pltpu.PrefetchScalarGridSpec(
            num_scalar_prefetch=0,
            grid=grid,
            in_specs=[
                pl.BlockSpec((nslab, _NSUB * gs), lambda j: (0, 0)),  # x_slab (whole)
                pl.BlockSpec((G, tn), lambda j: (0, j)),              # plane 0
                pl.BlockSpec((G, tn), lambda j: (0, j)),              # plane 1
                pl.BlockSpec((G, tn), lambda j: (0, j)),              # plane 2
                pl.BlockSpec((2, tn), lambda j: (0, j)),              # [scales; eps]
            ],
            out_specs=pl.BlockSpec((1, tn), lambda j: (0, j)),
            scratch_shapes=[pltpu.VMEM((_NSUB * gs, tn), jnp.bfloat16)],
        ),
        compiler_params=pltpu.CompilerParams(
            dimension_semantics=("parallel",),
            vmem_limit_bytes=48 * 1024 * 1024,
        ),
    )(x_slab, q0, q1, q2, vec)

    outshape = x.shape[:-1] + (N,)
    return out.reshape(outshape).astype(x.dtype)


# ---------------------------------------------------------------------------
# Deterministic synthetic setup + check
# ---------------------------------------------------------------------------
if __name__ == "__main__":
    infeatures = 512     # K (=> G = 16 groups of 32, one slab of gs=16)
    outfeatures = 1024   # N (=> tn = 512, grid of 2)

    key = jax.random.PRNGKey(0)
    k_w, k_s, k_z, k_b, k_x = jax.random.split(key, 5)

    # synthetic 3-bit integer weights, layout (in, out)
    intweight = jax.random.randint(k_w, (infeatures, outfeatures), 0, 8, dtype=jnp.int32)
    scales_v = jax.random.uniform(k_s, (outfeatures,), jnp.float32, 0.01, 0.1)
    zp = jax.random.randint(k_z, (outfeatures,), 0, 8, dtype=jnp.int32).astype(jnp.float32)
    zeros_v = zp * scales_v                     # module stores zeros = zero_point * scales
    bias_v = jax.random.normal(k_b, (outfeatures,), jnp.float32)

    # pack exactly like Quant3Linear.pack(), then one-time host repack to bit planes
    qweight_np = pack3(np.asarray(intweight))
    q0_np, q1_np, q2_np = repack_bitplanes(qweight_np)
    q0, q1, q2 = jnp.asarray(q0_np), jnp.asarray(q1_np), jnp.asarray(q2_np)

    # single-token input, shape (1, 1, K)  (x.numel() == x.shape[-1] holds)
    x = jax.random.normal(k_x, (1, 1, infeatures), jnp.float32)

    y = quant3linear_forward(x, q0, q1, q2, scales_v, zeros_v, bias_v)
    y = jax.block_until_ready(y)
    assert y.shape == (1, 1, outfeatures)

    # Tight reference: same bf16-rounded x on the quantized matmul, f32 sum(x).
    x32 = x.reshape(1, infeatures).astype(jnp.float32)
    x_b = x32.astype(jnp.bfloat16).astype(jnp.float32)
    qx = x_b @ intweight.astype(jnp.float32)
    y_tight = (bias_v[None, :] + scales_v[None, :] * qx
               - zeros_v[None, :] * jnp.sum(x32)).reshape(1, 1, outfeatures)
    np.testing.assert_allclose(np.asarray(y), np.asarray(y_tight), rtol=2e-3, atol=2e-3)

    # Loose reference: exact f32 semantics of the original module (x not rounded).
    w_deq = intweight.astype(jnp.float32) * scales_v[None, :] - zeros_v[None, :]
    y_loose = (x32 @ w_deq + bias_v[None, :]).reshape(1, 1, outfeatures)
    np.testing.assert_allclose(np.asarray(y), np.asarray(y_loose), rtol=5e-2, atol=5e-2)

    print("KERNEL_OK")
</pallas_src>

<mosaic_0001>
module attributes {stable_mosaic.version = 11 : i64} {
  func.func @kernel(%arg0: i32, %arg1: memref<1x544xbf16, #tpu.memory_space<vmem>>, %arg2: memref<16x512xi32, #tpu.memory_space<vmem>>, %arg3: memref<16x512xi32, #tpu.memory_space<vmem>>, %arg4: memref<16x512xi32, #tpu.memory_space<vmem>>, %arg5: memref<2x512xf32, #tpu.memory_space<vmem>>, %arg6: memref<1x512xf32, #tpu.memory_space<vmem>>, %arg7: memref<544x512xbf16, #tpu.memory_space<vmem>>) attributes {dimension_semantics = [#tpu.dimension_semantics<parallel>], iteration_bounds = array<i64: 2>, scalar_prefetch = 0 : i64, scratch_operands = 1 : i64, tpu.core_type = #tpu.core_type<tc>, window_params = [{pipeline_mode = #tpu.pipeline_mode<synchronous>, transform_indices = @transform_0, window_bounds = array<i64: 1, 544>}, {transform_indices = @transform_1, window_bounds = array<i64: 16, 512>}, {transform_indices = @transform_2, window_bounds = array<i64: 16, 512>}, {transform_indices = @transform_3, window_bounds = array<i64: 16, 512>}, {transform_indices = @transform_4, window_bounds = array<i64: 2, 512>}, {transform_indices = @transform_5, window_bounds = array<i64: 1, 512>}]} {
    %cst = arith.constant 0.000000e+00 : f32
    %0 = vector.broadcast %cst : f32 to vector<1x512xf32>
    %c0 = arith.constant 0 : index
    %c0_0 = arith.constant 0 : index
    %1 = vector.load %arg2[%c0, %c0_0] : memref<16x512xi32, #tpu.memory_space<vmem>>, vector<16x512xi32>
    %2 = tpu.bitcast %1 : vector<16x512xi32> -> vector<16x512xi32>
    %c7_i32 = arith.constant 7 : i32
    %3 = vector.broadcast %c7_i32 : i32 to vector<16x512xi32>
    %4 = arith.andi %2, %3 : vector<16x512xi32>
    %5 = tpu.bitcast %4 : vector<16x512xi32> -> vector<16x512xi32>
    %6 = arith.sitofp %5 : vector<16x512xi32> to vector<16x512xf32>
    %7 = arith.truncf %6 : vector<16x512xf32> to vector<16x512xbf16>
    %c0_1 = arith.constant 0 : index
    %c0_2 = arith.constant 0 : index
    %8 = vector.load %arg7[%c0_1, %c0_2] : memref<544x512xbf16, #tpu.memory_space<vmem>>, vector<16x512xbf16>
    tpu.vector_store %arg7[%c0_1, %c0_2], %7 {strides = array<i32>} : memref<544x512xbf16, #tpu.memory_space<vmem>>, vector<16x512xbf16>,
    %c0_3 = arith.constant 0 : index
    %c0_4 = arith.constant 0 : index
    %9 = vector.load %arg2[%c0_3, %c0_4] : memref<16x512xi32, #tpu.memory_space<vmem>>, vector<16x512xi32>
    %10 = tpu.bitcast %9 : vector<16x512xi32> -> vector<16x512xi32>
    %c56_i32 = arith.constant 56 : i32
    %11 = vector.broadcast %c56_i32 : i32 to vector<16x512xi32>
    %12 = arith.andi %10, %11 : vector<16x512xi32>
    %13 = tpu.bitcast %12 : vector<16x512xi32> -> vector<16x512xi32>
    %14 = arith.sitofp %13 : vector<16x512xi32> to vector<16x512xf32>
    %15 = arith.truncf %14 : vector<16x512xf32> to vector<16x512xbf16>
    %c16 = arith.constant 16 : index
    %c0_5 = arith.constant 0 : index
    %16 = vector.load %arg7[%c16, %c0_5] : memref<544x512xbf16, #tpu.memory_space<vmem>>, vector<16x512xbf16>
    tpu.vector_store %arg7[%c16, %c0_5], %15 {strides = array<i32>} : memref<544x512xbf16, #tpu.memory_space<vmem>>, vector<16x512xbf16>,
    %c0_6 = arith.constant 0 : index
    %c0_7 = arith.constant 0 : index
    %17 = vector.load %arg2[%c0_6, %c0_7] : memref<16x512xi32, #tpu.memory_space<vmem>>, vector<16x512xi32>
    %18 = tpu.bitcast %17 : vector<16x512xi32> -> vector<16x512xi32>
    %c448_i32 = arith.constant 448 : i32
    %19 = vector.broadcast %c448_i32 : i32 to vector<16x512xi32>
    %20 = arith.andi %18, %19 : vector<16x512xi32>
    %21 = tpu.bitcast %20 : vector<16x512xi32> -> vector<16x512xi32>
    %22 = arith.sitofp %21 : vector<16x512xi32> to vector<16x512xf32>
    %23 = arith.truncf %22 : vector<16x512xf32> to vector<16x512xbf16>
    %c32 = arith.constant 32 : index
    %c0_8 = arith.constant 0 : index
    %24 = vector.load %arg7[%c32, %c0_8] : memref<544x512xbf16, #tpu.memory_space<vmem>>, vector<16x512xbf16>
    tpu.vector_store %arg7[%c32, %c0_8], %23 {strides = array<i32>} : memref<544x512xbf16, #tpu.memory_space<vmem>>, vector<16x512xbf16>,
    %c0_9 = arith.constant 0 : index
    %c0_10 = arith.constant 0 : index
    %25 = vector.load %arg2[%c0_9, %c0_10] : memref<16x512xi32, #tpu.memory_space<vmem>>, vector<16x512xi32>
    %26 = tpu.bitcast %25 : vector<16x512xi32> -> vector<16x512xi32>
    %c3584_i32 = arith.constant 3584 : i32
    %27 = vector.broadcast %c3584_i32 : i32 to vector<16x512xi32>
    %28 = arith.andi %26, %27 : vector<16x512xi32>
    %29 = tpu.bitcast %28 : vector<16x512xi32> -> vector<16x512xi32>
    %30 = arith.sitofp %29 : vector<16x512xi32> to vector<16x512xf32>
    %31 = arith.truncf %30 : vector<16x512xf32> to vector<16x512xbf16>
    %c48 = arith.constant 48 : index
    %c0_11 = arith.constant 0 : index
    %32 = vector.load %arg7[%c48, %c0_11] : memref<544x512xbf16, #tpu.memory_space<vmem>>, vector<16x512xbf16>
    tpu.vector_store %arg7[%c48, %c0_11], %31 {strides = array<i32>} : memref<544x512xbf16, #tpu.memory_space<vmem>>, vector<16x512xbf16>,
    %c0_12 = arith.constant 0 : index
    %c0_13 = arith.constant 0 : index
    %33 = vector.load %arg2[%c0_12, %c0_13] : memref<16x512xi32, #tpu.memory_space<vmem>>, vector<16x512xi32>
    %34 = tpu.bitcast %33 : vector<16x512xi32> -> vector<16x512xi32>
    %c28672_i32 = arith.constant 28672 : i32
    %35 = vector.broadcast %c28672_i32 : i32 to vector<16x512xi32>
    %36 = arith.andi %34, %35 : vector<16x512xi32>
    %37 = tpu.bitcast %36 : vector<16x512xi32> -> vector<16x512xi32>
    %38 = arith.sitofp %37 : vector<16x512xi32> to vector<16x512xf32>
    %39 = arith.truncf %38 : vector<16x512xf32> to vector<16x512xbf16>
    %c64 = arith.constant 64 : index
    %c0_14 = arith.constant 0 : index
    %40 = vector.load %arg7[%c64, %c0_14] : memref<544x512xbf16, #tpu.memory_space<vmem>>, vector<16x512xbf16>
    tpu.vector_store %arg7[%c64, %c0_14], %39 {strides = array<i32>} : memref<544x512xbf16, #tpu.memory_space<vmem>>, vector<16x512xbf16>,
    %c0_15 = arith.constant 0 : index
    %c0_16 = arith.constant 0 : index
    %41 = vector.load %arg2[%c0_15, %c0_16] : memref<16x512xi32, #tpu.memory_space<vmem>>, vector<16x512xi32>
    %42 = tpu.bitcast %41 : vector<16x512xi32> -> vector<16x512xi32>
    %c229376_i32 = arith.constant 229376 : i32
    %43 = vector.broadcast %c229376_i32 : i32 to vector<16x512xi32>
    %44 = arith.andi %42, %43 : vector<16x512xi32>
    %45 = tpu.bitcast %44 : vector<16x512xi32> -> vector<16x512xi32>
    %46 = arith.sitofp %45 : vector<16x512xi32> to vector<16x512xf32>
    %47 = arith.truncf %46 : vector<16x512xf32> to vector<16x512xbf16>
    %c80 = arith.constant 80 : index
    %c0_17 = arith.constant 0 : index
    %48 = vector.load %arg7[%c80, %c0_17] : memref<544x512xbf16, #tpu.memory_space<vmem>>, vector<16x512xbf16>
    tpu.vector_store %arg7[%c80, %c0_17], %47 {strides = array<i32>} : memref<544x512xbf16, #tpu.memory_space<vmem>>, vector<16x512xbf16>,
    %c0_18 = arith.constant 0 : index
    %c0_19 = arith.constant 0 : index
    %49 = vector.load %arg2[%c0_18, %c0_19] : memref<16x512xi32, #tpu.memory_space<vmem>>, vector<16x512xi32>
    %50 = tpu.bitcast %49 : vector<16x512xi32> -> vector<16x512xi32>
    %c1835008_i32 = arith.constant 1835008 : i32
    %51 = vector.broadcast %c1835008_i32 : i32 to vector<16x512xi32>
    %52 = arith.andi %50, %51 : vector<16x512xi32>
    %53 = tpu.bitcast %52 : vector<16x512xi32> -> vector<16x512xi32>
    %54 = arith.sitofp %53 : vector<16x512xi32> to vector<16x512xf32>
    %55 = arith.truncf %54 : vector<16x512xf32> to vector<16x512xbf16>
    %c96 = arith.constant 96 : index
    %c0_20 = arith.constant 0 : index
    %56 = vector.load %arg7[%c96, %c0_20] : memref<544x512xbf16, #tpu.memory_space<vmem>>, vector<16x512xbf16>
    tpu.vector_store %arg7[%c96, %c0_20], %55 {strides = array<i32>} : memref<544x512xbf16, #tpu.memory_space<vmem>>, vector<16x512xbf16>,
    %c0_21 = arith.constant 0 : index
    %c0_22 = arith.constant 0 : index
    %57 = vector.load %arg2[%c0_21, %c0_22] : memref<16x512xi32, #tpu.memory_space<vmem>>, vector<16x512xi32>
    %58 = tpu.bitcast %57 : vector<16x512xi32> -> vector<16x512xi32>
    %c14680064_i32 = arith.constant 14680064 : i32
    %59 = vector.broadcast %c14680064_i32 : i32 to vector<16x512xi32>
    %60 = arith.andi %58, %59 : vector<16x512xi32>
    %61 = tpu.bitcast %60 : vector<16x512xi32> -> vector<16x512xi32>
    %62 = arith.sitofp %61 : vector<16x512xi32> to vector<16x512xf32>
    %63 = arith.truncf %62 : vector<16x512xf32> to vector<16x512xbf16>
    %c112 = arith.constant 112 : index
    %c0_23 = arith.constant 0 : index
    %64 = vector.load %arg7[%c112, %c0_23] : memref<544x512xbf16, #tpu.memory_space<vmem>>, vector<16x512xbf16>
    tpu.vector_store %arg7[%c112, %c0_23], %63 {strides = array<i32>} : memref<544x512xbf16, #tpu.memory_space<vmem>>, vector<16x512xbf16>,
    %c0_24 = arith.constant 0 : index
    %c0_25 = arith.constant 0 : index
    %65 = vector.load %arg2[%c0_24, %c0_25] : memref<16x512xi32, #tpu.memory_space<vmem>>, vector<16x512xi32>
    %66 = tpu.bitcast %65 : vector<16x512xi32> -> vector<16x512xi32>
    %c117440512_i32 = arith.constant 117440512 : i32
    %67 = vector.broadcast %c117440512_i32 : i32 to vector<16x512xi32>
    %68 = arith.andi %66, %67 : vector<16x512xi32>
    %69 = tpu.bitcast %68 : vector<16x512xi32> -> vector<16x512xi32>
    %70 = arith.sitofp %69 : vector<16x512xi32> to vector<16x512xf32>
    %71 = arith.truncf %70 : vector<16x512xf32> to vector<16x512xbf16>
    %c128 = arith.constant 128 : index
    %c0_26 = arith.constant 0 : index
    %72 = vector.load %arg7[%c128, %c0_26] : memref<544x512xbf16, #tpu.memory_space<vmem>>, vector<16x512xbf16>
    tpu.vector_store %arg7[%c128, %c0_26], %71 {strides = array<i32>} : memref<544x512xbf16, #tpu.memory_space<vmem>>, vector<16x512xbf16>,
    %c0_27 = arith.constant 0 : index
    %c0_28 = arith.constant 0 : index
    %73 = vector.load %arg2[%c0_27, %c0_28] : memref<16x512xi32, #tpu.memory_space<vmem>>, vector<16x512xi32>
    %74 = tpu.bitcast %73 : vector<16x512xi32> -> vector<16x512xi32>
    %c939524096_i32 = arith.constant 939524096 : i32
    %75 = vector.broadcast %c939524096_i32 : i32 to vector<16x512xi32>
    %76 = arith.andi %74, %75 : vector<16x512xi32>
    %77 = tpu.bitcast %76 : vector<16x512xi32> -> vector<16x512xi32>
    %78 = arith.sitofp %77 : vector<16x512xi32> to vector<16x512xf32>
    %79 = arith.truncf %78 : vector<16x512xf32> to vector<16x512xbf16>
    %c144 = arith.constant 144 : index
    %c0_29 = arith.constant 0 : index
    %80 = vector.load %arg7[%c144, %c0_29] : memref<544x512xbf16, #tpu.memory_space<vmem>>, vector<16x512xbf16>
    tpu.vector_store %arg7[%c144, %c0_29], %79 {strides = array<i32>} : memref<544x512xbf16, #tpu.memory_space<vmem>>, vector<16x512xbf16>,
    %c0_30 = arith.constant 0 : index
    %c0_31 = arith.constant 0 : index
    %81 = vector.load %arg2[%c0_30, %c0_31] : memref<16x512xi32, #tpu.memory_space<vmem>>, vector<16x512xi32>
    %82 = tpu.bitcast %81 : vector<16x512xi32> -> vector<16x512xi32>
    %c30_i32 = arith.constant 30 : i32
    %83 = vector.broadcast %c30_i32 : i32 to vector<16x512xi32>
    %84 = arith.shrui %82, %83 : vector<16x512xi32>
    %85 = tpu.bitcast %84 : vector<16x512xi32> -> vector<16x512xi32>
    %86 = arith.sitofp %85 : vector<16x512xi32> to vector<16x512xf32>
    %87 = arith.truncf %86 : vector<16x512xf32> to vector<16x512xbf16>
    %c160 = arith.constant 160 : index
    %c0_32 = arith.constant 0 : index
    %88 = vector.load %arg7[%c160, %c0_32] : memref<544x512xbf16, #tpu.memory_space<vmem>>, vector<16x512xbf16>
    tpu.vector_store %arg7[%c160, %c0_32], %87 {strides = array<i32>} : memref<544x512xbf16, #tpu.memory_space<vmem>>, vector<16x512xbf16>,
    %c0_33 = arith.constant 0 : index
    %c0_34 = arith.constant 0 : index
    %89 = vector.load %arg3[%c0_33, %c0_34] : memref<16x512xi32, #tpu.memory_space<vmem>>, vector<16x512xi32>
    %90 = tpu.bitcast %89 : vector<16x512xi32> -> vector<16x512xi32>
    %c1_i32 = arith.constant 1 : i32
    %91 = vector.broadcast %c1_i32 : i32 to vector<16x512xi32>
    %92 = arith.andi %90, %91 : vector<16x512xi32>
    %93 = tpu.bitcast %92 : vector<16x512xi32> -> vector<16x512xi32>
    %94 = arith.sitofp %93 : vector<16x512xi32> to vector<16x512xf32>
    %95 = arith.truncf %94 : vector<16x512xf32> to vector<16x512xbf16>
    %c176 = arith.constant 176 : index
    %c0_35 = arith.constant 0 : index
    %96 = vector.load %arg7[%c176, %c0_35] : memref<544x512xbf16, #tpu.memory_space<vmem>>, vector<16x512xbf16>
    tpu.vector_store %arg7[%c176, %c0_35], %95 {strides = array<i32>} : memref<544x512xbf16, #tpu.memory_space<vmem>>, vector<16x512xbf16>,
    %c0_36 = arith.constant 0 : index
    %c0_37 = arith.constant 0 : index
    %97 = vector.load %arg3[%c0_36, %c0_37] : memref<16x512xi32, #tpu.memory_space<vmem>>, vector<16x512xi32>
    %98 = tpu.bitcast %97 : vector<16x512xi32> -> vector<16x512xi32>
    %c14_i32 = arith.constant 14 : i32
    %99 = vector.broadcast %c14_i32 : i32 to vector<16x512xi32>
    %100 = arith.andi %98, %99 : vector<16x512xi32>
    %101 = tpu.bitcast %100 : vector<16x512xi32> -> vector<16x512xi32>
    %102 = arith.sitofp %101 : vector<16x512xi32> to vector<16x512xf32>
    %103 = arith.truncf %102 : vector<16x512xf32> to vector<16x512xbf16>
    %c192 = arith.constant 192 : index
    %c0_38 = arith.constant 0 : index
    %104 = vector.load %arg7[%c192, %c0_38] : memref<544x512xbf16, #tpu.memory_space<vmem>>, vector<16x512xbf16>
    tpu.vector_store %arg7[%c192, %c0_38], %103 {strides = array<i32>} : memref<544x512xbf16, #tpu.memory_space<vmem>>, vector<16x512xbf16>,
    %c0_39 = arith.constant 0 : index
    %c0_40 = arith.constant 0 : index
    %105 = vector.load %arg3[%c0_39, %c0_40] : memref<16x512xi32, #tpu.memory_space<vmem>>, vector<16x512xi32>
    %106 = tpu.bitcast %105 : vector<16x512xi32> -> vector<16x512xi32>
    %c112_i32 = arith.constant 112 : i32
    %107 = vector.broadcast %c112_i32 : i32 to vector<16x512xi32>
    %108 = arith.andi %106, %107 : vector<16x512xi32>
    %109 = tpu.bitcast %108 : vector<16x512xi32> -> vector<16x512xi32>
    %110 = arith.sitofp %109 : vector<16x512xi32> to vector<16x512xf32>
    %111 = arith.truncf %110 : vector<16x512xf32> to vector<16x512xbf16>
    %c208 = arith.constant 208 : index
    %c0_41 = arith.constant 0 : index
    %112 = vector.load %arg7[%c208, %c0_41] : memref<544x512xbf16, #tpu.memory_space<vmem>>, vector<16x512xbf16>
    tpu.vector_store %arg7[%c208, %c0_41], %111 {strides = array<i32>} : memref<544x512xbf16, #tpu.memory_space<vmem>>, vector<16x512xbf16>,
    %c0_42 = arith.constant 0 : index
    %c0_43 = arith.constant 0 : index
    %113 = vector.load %arg3[%c0_42, %c0_43] : memref<16x512xi32, #tpu.memory_space<vmem>>, vector<16x512xi32>
    %114 = tpu.bitcast %113 : vector<16x512xi32> -> vector<16x512xi32>
    %c896_i32 = arith.constant 896 : i32
    %115 = vector.broadcast %c896_i32 : i32 to vector<16x512xi32>
    %116 = arith.andi %114, %115 : vector<16x512xi32>
    %117 = tpu.bitcast %116 : vector<16x512xi32> -> vector<16x512xi32>
    %118 = arith.sitofp %117 : vector<16x512xi32> to vector<16x512xf32>
    %119 = arith.truncf %118 : vector<16x512xf32> to vector<16x512xbf16>
    %c224 = arith.constant 224 : index
    %c0_44 = arith.constant 0 : index
    %120 = vector.load %arg7[%c224, %c0_44] : memref<544x512xbf16, #tpu.memory_space<vmem>>, vector<16x512xbf16>
    tpu.vector_store %arg7[%c224, %c0_44], %119 {strides = array<i32>} : memref<544x512xbf16, #tpu.memory_space<vmem>>, vector<16x512xbf16>,
    %c0_45 = arith.constant 0 : index
    %c0_46 = arith.constant 0 : index
    %121 = vector.load %arg3[%c0_45, %c0_46] : memref<16x512xi32, #tpu.memory_space<vmem>>, vector<16x512xi32>
    %122 = tpu.bitcast %121 : vector<16x512xi32> -> vector<16x512xi32>
    %c7168_i32 = arith.constant 7168 : i32
    %123 = vector.broadcast %c7168_i32 : i32 to vector<16x512xi32>
    %124 = arith.andi %122, %123 : vector<16x512xi32>
    %125 = tpu.bitcast %124 : vector<16x512xi32> -> vector<16x512xi32>
    %126 = arith.sitofp %125 : vector<16x512xi32> to vector<16x512xf32>
    %127 = arith.truncf %126 : vector<16x512xf32> to vector<16x512xbf16>
    %c240 = arith.constant 240 : index
    %c0_47 = arith.constant 0 : index
    %128 = vector.load %arg7[%c240, %c0_47] : memref<544x512xbf16, #tpu.memory_space<vmem>>, vector<16x512xbf16>
    tpu.vector_store %arg7[%c240, %c0_47], %127 {strides = array<i32>} : memref<544x512xbf16, #tpu.memory_space<vmem>>, vector<16x512xbf16>,
    %c0_48 = arith.constant 0 : index
    %c0_49 = arith.constant 0 : index
    %129 = vector.load %arg3[%c0_48, %c0_49] : memref<16x512xi32, #tpu.memory_space<vmem>>, vector<16x512xi32>
    %130 = tpu.bitcast %129 : vector<16x512xi32> -> vector<16x512xi32>
    %c57344_i32 = arith.constant 57344 : i32
    %131 = vector.broadcast %c57344_i32 : i32 to vector<16x512xi32>
    %132 = arith.andi %130, %131 : vector<16x512xi32>
    %133 = tpu.bitcast %132 : vector<16x512xi32> -> vector<16x512xi32>
    %134 = arith.sitofp %133 : vector<16x512xi32> to vector<16x512xf32>
    %135 = arith.truncf %134 : vector<16x512xf32> to vector<16x512xbf16>
    %c256 = arith.constant 256 : index
    %c0_50 = arith.constant 0 : index
    %136 = vector.load %arg7[%c256, %c0_50] : memref<544x512xbf16, #tpu.memory_space<vmem>>, vector<16x512xbf16>
    tpu.vector_store %arg7[%c256, %c0_50], %135 {strides = array<i32>} : memref<544x512xbf16, #tpu.memory_space<vmem>>, vector<16x512xbf16>,
    %c0_51 = arith.constant 0 : index
    %c0_52 = arith.constant 0 : index
    %137 = vector.load %arg3[%c0_51, %c0_52] : memref<16x512xi32, #tpu.memory_space<vmem>>, vector<16x512xi32>
    %138 = tpu.bitcast %137 : vector<16x512xi32> -> vector<16x512xi32>
    %c458752_i32 = arith.constant 458752 : i32
    %139 = vector.broadcast %c458752_i32 : i32 to vector<16x512xi32>
    %140 = arith.andi %138, %139 : vector<16x512xi32>
    %141 = tpu.bitcast %140 : vector<16x512xi32> -> vector<16x512xi32>
    %142 = arith.sitofp %141 : vector<16x512xi32> to vector<16x512xf32>
    %143 = arith.truncf %142 : vector<16x512xf32> to vector<16x512xbf16>
    %c272 = arith.constant 272 : index
    %c0_53 = arith.constant 0 : index
    %144 = vector.load %arg7[%c272, %c0_53] : memref<544x512xbf16, #tpu.memory_space<vmem>>, vector<16x512xbf16>
    tpu.vector_store %arg7[%c272, %c0_53], %143 {strides = array<i32>} : memref<544x512xbf16, #tpu.memory_space<vmem>>, vector<16x512xbf16>,
    %c0_54 = arith.constant 0 : index
    %c0_55 = arith.constant 0 : index
    %145 = vector.load %arg3[%c0_54, %c0_55] : memref<16x512xi32, #tpu.memory_space<vmem>>, vector<16x512xi32>
    %146 = tpu.bitcast %145 : vector<16x512xi32> -> vector<16x512xi32>
    %c3670016_i32 = arith.constant 3670016 : i32
    %147 = vector.broadcast %c3670016_i32 : i32 to vector<16x512xi32>
    %148 = arith.andi %146, %147 : vector<16x512xi32>
    %149 = tpu.bitcast %148 : vector<16x512xi32> -> vector<16x512xi32>
    %150 = arith.sitofp %149 : vector<16x512xi32> to vector<16x512xf32>
    %151 = arith.truncf %150 : vector<16x512xf32> to vector<16x512xbf16>
    %c288 = arith.constant 288 : index
    %c0_56 = arith.constant 0 : index
    %152 = vector.load %arg7[%c288, %c0_56] : memref<544x512xbf16, #tpu.memory_space<vmem>>, vector<16x512xbf16>
    tpu.vector_store %arg7[%c288, %c0_56], %151 {strides = array<i32>} : memref<544x512xbf16, #tpu.memory_space<vmem>>, vector<16x512xbf16>,
    %c0_57 = arith.constant 0 : index
    %c0_58 = arith.constant 0 : index
    %153 = vector.load %arg3[%c0_57, %c0_58] : memref<16x512xi32, #tpu.memory_space<vmem>>, vector<16x512xi32>
    %154 = tpu.bitcast %153 : vector<16x512xi32> -> vector<16x512xi32>
    %c29360128_i32 = arith.constant 29360128 : i32
    %155 = vector.broadcast %c29360128_i32 : i32 to vector<16x512xi32>
    %156 = arith.andi %154, %155 : vector<16x512xi32>
    %157 = tpu.bitcast %156 : vector<16x512xi32> -> vector<16x512xi32>
    %158 = arith.sitofp %157 : vector<16x512xi32> to vector<16x512xf32>
    %159 = arith.truncf %158 : vector<16x512xf32> to vector<16x512xbf16>
    %c304 = arith.constant 304 : index
    %c0_59 = arith.constant 0 : index
    %160 = vector.load %arg7[%c304, %c0_59] : memref<544x512xbf16, #tpu.memory_space<vmem>>, vector<16x512xbf16>
    tpu.vector_store %arg7[%c304, %c0_59], %159 {strides = array<i32>} : memref<544x512xbf16, #tpu.memory_space<vmem>>, vector<16x512xbf16>,
    %c0_60 = arith.constant 0 : index
    %c0_61 = arith.constant 0 : index
    %161 = vector.load %arg3[%c0_60, %c0_61] : memref<16x512xi32, #tpu.memory_space<vmem>>, vector<16x512xi32>
    %162 = tpu.bitcast %161 : vector<16x512xi32> -> vector<16x512xi32>
    %c234881024_i32 = arith.constant 234881024 : i32
    %163 = vector.broadcast %c234881024_i32 : i32 to vector<16x512xi32>
    %164 = arith.andi %162, %163 : vector<16x512xi32>
    %165 = tpu.bitcast %164 : vector<16x512xi32> -> vector<16x512xi32>
    %166 = arith.sitofp %165 : vector<16x512xi32> to vector<16x512xf32>
    %167 = arith.truncf %166 : vector<16x512xf32> to vector<16x512xbf16>
    %c320 = arith.constant 320 : index
    %c0_62 = arith.constant 0 : index
    %168 = vector.load %arg7[%c320, %c0_62] : memref<544x512xbf16, #tpu.memory_space<vmem>>, vector<16x512xbf16>
    tpu.vector_store %arg7[%c320, %c0_62], %167 {strides = array<i32>} : memref<544x512xbf16, #tpu.memory_space<vmem>>, vector<16x512xbf16>,
    %c0_63 = arith.constant 0 : index
    %c0_64 = arith.constant 0 : index
    %169 = vector.load %arg3[%c0_63, %c0_64] : memref<16x512xi32, #tpu.memory_space<vmem>>, vector<16x512xi32>
    %170 = tpu.bitcast %169 : vector<16x512xi32> -> vector<16x512xi32>
    %c1879048192_i32 = arith.constant 1879048192 : i32
    %171 = vector.broadcast %c1879048192_i32 : i32 to vector<16x512xi32>
    %172 = arith.andi %170, %171 : vector<16x512xi32>
    %173 = tpu.bitcast %172 : vector<16x512xi32> -> vector<16x512xi32>
    %174 = arith.sitofp %173 : vector<16x512xi32> to vector<16x512xf32>
    %175 = arith.truncf %174 : vector<16x512xf32> to vector<16x512xbf16>
    %c336 = arith.constant 336 : index
    %c0_65 = arith.constant 0 : index
    %176 = vector.load %arg7[%c336, %c0_65] : memref<544x512xbf16, #tpu.memory_space<vmem>>, vector<16x512xbf16>
    tpu.vector_store %arg7[%c336, %c0_65], %175 {strides = array<i32>} : memref<544x512xbf16, #tpu.memory_space<vmem>>, vector<16x512xbf16>,
    %c0_66 = arith.constant 0 : index
    %c0_67 = arith.constant 0 : index
    %177 = vector.load %arg3[%c0_66, %c0_67] : memref<16x512xi32, #tpu.memory_space<vmem>>, vector<16x512xi32>
    %178 = tpu.bitcast %177 : vector<16x512xi32> -> vector<16x512xi32>
    %c31_i32 = arith.constant 31 : i32
    %179 = vector.broadcast %c31_i32 : i32 to vector<16x512xi32>
    %180 = arith.shrui %178, %179 : vector<16x512xi32>
    %181 = tpu.bitcast %180 : vector<16x512xi32> -> vector<16x512xi32>
    %182 = arith.sitofp %181 : vector<16x512xi32> to vector<16x512xf32>
    %183 = arith.truncf %182 : vector<16x512xf32> to vector<16x512xbf16>
    %c352 = arith.constant 352 : index
    %c0_68 = arith.constant 0 : index
    %184 = vector.load %arg7[%c352, %c0_68] : memref<544x512xbf16, #tpu.memory_space<vmem>>, vector<16x512xbf16>
    tpu.vector_store %arg7[%c352, %c0_68], %183 {strides = array<i32>} : memref<544x512xbf16, #tpu.memory_space<vmem>>, vector<16x512xbf16>,
    %c0_69 = arith.constant 0 : index
    %c0_70 = arith.constant 0 : index
    %185 = vector.load %arg4[%c0_69, %c0_70] : memref<16x512xi32, #tpu.memory_space<vmem>>, vector<16x512xi32>
    %186 = tpu.bitcast %185 : vector<16x512xi32> -> vector<16x512xi32>
    %c3_i32 = arith.constant 3 : i32
    %187 = vector.broadcast %c3_i32 : i32 to vector<16x512xi32>
    %188 = arith.andi %186, %187 : vector<16x512xi32>
    %189 = tpu.bitcast %188 : vector<16x512xi32> -> vector<16x512xi32>
    %190 = arith.sitofp %189 : vector<16x512xi32> to vector<16x512xf32>
    %191 = arith.truncf %190 : vector<16x512xf32> to vector<16x512xbf16>
    %c368 = arith.constant 368 : index
    %c0_71 = arith.constant 0 : index
    %192 = vector.load %arg7[%c368, %c0_71] : memref<544x512xbf16, #tpu.memory_space<vmem>>, vector<16x512xbf16>
    tpu.vector_store %arg7[%c368, %c0_71], %191 {strides = array<i32>} : memref<544x512xbf16, #tpu.memory_space<vmem>>, vector<16x512xbf16>,
    %c0_72 = arith.constant 0 : index
    %c0_73 = arith.constant 0 : index
    %193 = vector.load %arg4[%c0_72, %c0_73] : memref<16x512xi32, #tpu.memory_space<vmem>>, vector<16x512xi32>
    %194 = tpu.bitcast %193 : vector<16x512xi32> -> vector<16x512xi32>
    %c28_i32 = arith.constant 28 : i32
    %195 = vector.broadcast %c28_i32 : i32 to vector<16x512xi32>
    %196 = arith.andi %194, %195 : vector<16x512xi32>
    %197 = tpu.bitcast %196 : vector<16x512xi32> -> vector<16x512xi32>
    %198 = arith.sitofp %197 : vector<16x512xi32> to vector<16x512xf32>
    %199 = arith.truncf %198 : vector<16x512xf32> to vector<16x512xbf16>
    %c384 = arith.constant 384 : index
    %c0_74 = arith.constant 0 : index
    %200 = vector.load %arg7[%c384, %c0_74] : memref<544x512xbf16, #tpu.memory_space<vmem>>, vector<16x512xbf16>
    tpu.vector_store %arg7[%c384, %c0_74], %199 {strides = array<i32>} : memref<544x512xbf16, #tpu.memory_space<vmem>>, vector<16x512xbf16>,
    %c0_75 = arith.constant 0 : index
    %c0_76 = arith.constant 0 : index
    %201 = vector.load %arg4[%c0_75, %c0_76] : memref<16x512xi32, #tpu.memory_space<vmem>>, vector<16x512xi32>
    %202 = tpu.bitcast %201 : vector<16x512xi32> -> vector<16x512xi32>
    %c224_i32 = arith.constant 224 : i32
    %203 = vector.broadcast %c224_i32 : i32 to vector<16x512xi32>
    %204 = arith.andi %202, %203 : vector<16x512xi32>
    %205 = tpu.bitcast %204 : vector<16x512xi32> -> vector<16x512xi32>
    %206 = arith.sitofp %205 : vector<16x512xi32> to vector<16x512xf32>
    %207 = arith.truncf %206 : vector<16x512xf32> to vector<16x512xbf16>
    %c400 = arith.constant 400 : index
    %c0_77 = arith.constant 0 : index
    %208 = vector.load %arg7[%c400, %c0_77] : memref<544x512xbf16, #tpu.memory_space<vmem>>, vector<16x512xbf16>
    tpu.vector_store %arg7[%c400, %c0_77], %207 {strides = array<i32>} : memref<544x512xbf16, #tpu.memory_space<vmem>>, vector<16x512xbf16>,
    %c0_78 = arith.constant 0 : index
    %c0_79 = arith.constant 0 : index
    %209 = vector.load %arg4[%c0_78, %c0_79] : memref<16x512xi32, #tpu.memory_space<vmem>>, vector<16x512xi32>
    %210 = tpu.bitcast %209 : vector<16x512xi32> -> vector<16x512xi32>
    %c1792_i32 = arith.constant 1792 : i32
    %211 = vector.broadcast %c1792_i32 : i32 to vector<16x512xi32>
    %212 = arith.andi %210, %211 : vector<16x512xi32>
    %213 = tpu.bitcast %212 : vector<16x512xi32> -> vector<16x512xi32>
    %214 = arith.sitofp %213 : vector<16x512xi32> to vector<16x512xf32>
    %215 = arith.truncf %214 : vector<16x512xf32> to vector<16x512xbf16>
    %c416 = arith.constant 416 : index
    %c0_80 = arith.constant 0 : index
    %216 = vector.load %arg7[%c416, %c0_80] : memref<544x512xbf16, #tpu.memory_space<vmem>>, vector<16x512xbf16>
    tpu.vector_store %arg7[%c416, %c0_80], %215 {strides = array<i32>} : memref<544x512xbf16, #tpu.memory_space<vmem>>, vector<16x512xbf16>,
    %c0_81 = arith.constant 0 : index
    %c0_82 = arith.constant 0 : index
    %217 = vector.load %arg4[%c0_81, %c0_82] : memref<16x512xi32, #tpu.memory_space<vmem>>, vector<16x512xi32>
    %218 = tpu.bitcast %217 : vector<16x512xi32> -> vector<16x512xi32>
    %c14336_i32 = arith.constant 14336 : i32
    %219 = vector.broadcast %c14336_i32 : i32 to vector<16x512xi32>
    %220 = arith.andi %218, %219 : vector<16x512xi32>
    %221 = tpu.bitcast %220 : vector<16x512xi32> -> vector<16x512xi32>
    %222 = arith.sitofp %221 : vector<16x512xi32> to vector<16x512xf32>
    %223 = arith.truncf %222 : vector<16x512xf32> to vector<16x512xbf16>
    %c432 = arith.constant 432 : index
    %c0_83 = arith.constant 0 : index
    %224 = vector.load %arg7[%c432, %c0_83] : memref<544x512xbf16, #tpu.memory_space<vmem>>, vector<16x512xbf16>
    tpu.vector_store %arg7[%c432, %c0_83], %223 {strides = array<i32>} : memref<544x512xbf16, #tpu.memory_space<vmem>>, vector<16x512xbf16>,
    %c0_84 = arith.constant 0 : index
    %c0_85 = arith.constant 0 : index
    %225 = vector.load %arg4[%c0_84, %c0_85] : memref<16x512xi32, #tpu.memory_space<vmem>>, vector<16x512xi32>
    %226 = tpu.bitcast %225 : vector<16x512xi32> -> vector<16x512xi32>
    %c114688_i32 = arith.constant 114688 : i32
    %227 = vector.broadcast %c114688_i32 : i32 to vector<16x512xi32>
    %228 = arith.andi %226, %227 : vector<16x512xi32>
    %229 = tpu.bitcast %228 : vector<16x512xi32> -> vector<16x512xi32>
    %230 = arith.sitofp %229 : vector<16x512xi32> to vector<16x512xf32>
    %231 = arith.truncf %230 : vector<16x512xf32> to vector<16x512xbf16>
    %c448 = arith.constant 448 : index
    %c0_86 = arith.constant 0 : index
    %232 = vector.load %arg7[%c448, %c0_86] : memref<544x512xbf16, #tpu.memory_space<vmem>>, vector<16x512xbf16>
    tpu.vector_store %arg7[%c448, %c0_86], %231 {strides = array<i32>} : memref<544x512xbf16, #tpu.memory_space<vmem>>, vector<16x512xbf16>,
    %c0_87 = arith.constant 0 : index
    %c0_88 = arith.constant 0 : index
    %233 = vector.load %arg4[%c0_87, %c0_88] : memref<16x512xi32, #tpu.memory_space<vmem>>, vector<16x512xi32>
    %234 = tpu.bitcast %233 : vector<16x512xi32> -> vector<16x512xi32>
    %c917504_i32 = arith.constant 917504 : i32
    %235 = vector.broadcast %c917504_i32 : i32 to vector<16x512xi32>
    %236 = arith.andi %234, %235 : vector<16x512xi32>
    %237 = tpu.bitcast %236 : vector<16x512xi32> -> vector<16x512xi32>
    %238 = arith.sitofp %237 : vector<16x512xi32> to vector<16x512xf32>
    %239 = arith.truncf %238 : vector<16x512xf32> to vector<16x512xbf16>
    %c464 = arith.constant 464 : index
    %c0_89 = arith.constant 0 : index
    %240 = vector.load %arg7[%c464, %c0_89] : memref<544x512xbf16, #tpu.memory_space<vmem>>, vector<16x512xbf16>
    tpu.vector_store %arg7[%c464, %c0_89], %239 {strides = array<i32>} : memref<544x512xbf16, #tpu.memory_space<vmem>>, vector<16x512xbf16>,
    %c0_90 = arith.constant 0 : index
    %c0_91 = arith.constant 0 : index
    %241 = vector.load %arg4[%c0_90, %c0_91] : memref<16x512xi32, #tpu.memory_space<vmem>>, vector<16x512xi32>
    %242 = tpu.bitcast %241 : vector<16x512xi32> -> vector<16x512xi32>
    %c7340032_i32 = arith.constant 7340032 : i32
    %243 = vector.broadcast %c7340032_i32 : i32 to vector<16x512xi32>
    %244 = arith.andi %242, %243 : vector<16x512xi32>
    %245 = tpu.bitcast %244 : vector<16x512xi32> -> vector<16x512xi32>
    %246 = arith.sitofp %245 : vector<16x512xi32> to vector<16x512xf32>
    %247 = arith.truncf %246 : vector<16x512xf32> to vector<16x512xbf16>
    %c480 = arith.constant 480 : index
    %c0_92 = arith.constant 0 : index
    %248 = vector.load %arg7[%c480, %c0_92] : memref<544x512xbf16, #tpu.memory_space<vmem>>, vector<16x512xbf16>
    tpu.vector_store %arg7[%c480, %c0_92], %247 {strides = array<i32>} : memref<544x512xbf16, #tpu.memory_space<vmem>>, vector<16x512xbf16>,
    %c0_93 = arith.constant 0 : index
    %c0_94 = arith.constant 0 : index
    %249 = vector.load %arg4[%c0_93, %c0_94] : memref<16x512xi32, #tpu.memory_space<vmem>>, vector<16x512xi32>
    %250 = tpu.bitcast %249 : vector<16x512xi32> -> vector<16x512xi32>
    %c58720256_i32 = arith.constant 58720256 : i32
    %251 = vector.broadcast %c58720256_i32 : i32 to vector<16x512xi32>
    %252 = arith.andi %250, %251 : vector<16x512xi32>
    %253 = tpu.bitcast %252 : vector<16x512xi32> -> vector<16x512xi32>
    %254 = arith.sitofp %253 : vector<16x512xi32> to vector<16x512xf32>
    %255 = arith.truncf %254 : vector<16x512xf32> to vector<16x512xbf16>
    %c496 = arith.constant 496 : index
    %c0_95 = arith.constant 0 : index
    %256 = vector.load %arg7[%c496, %c0_95] : memref<544x512xbf16, #tpu.memory_space<vmem>>, vector<16x512xbf16>
    tpu.vector_store %arg7[%c496, %c0_95], %255 {strides = array<i32>} : memref<544x512xbf16, #tpu.memory_space<vmem>>, vector<16x512xbf16>,
    %c0_96 = arith.constant 0 : index
    %c0_97 = arith.constant 0 : index
    %257 = vector.load %arg4[%c0_96, %c0_97] : memref<16x512xi32, #tpu.memory_space<vmem>>, vector<16x512xi32>
    %258 = tpu.bitcast %257 : vector<16x512xi32> -> vector<16x512xi32>
    %c469762048_i32 = arith.constant 469762048 : i32
    %259 = vector.broadcast %c469762048_i32 : i32 to vector<16x512xi32>
    %260 = arith.andi %258, %259 : vector<16x512xi32>
    %261 = tpu.bitcast %260 : vector<16x512xi32> -> vector<16x512xi32>
    %262 = arith.sitofp %261 : vector<16x512xi32> to vector<16x512xf32>
    %263 = arith.truncf %262 : vector<16x512xf32> to vector<16x512xbf16>
    %c512 = arith.constant 512 : index
    %c0_98 = arith.constant 0 : index
    %264 = vector.load %arg7[%c512, %c0_98] : memref<544x512xbf16, #tpu.memory_space<vmem>>, vector<16x512xbf16>
    tpu.vector_store %arg7[%c512, %c0_98], %263 {strides = array<i32>} : memref<544x512xbf16, #tpu.memory_space<vmem>>, vector<16x512xbf16>,
    %c0_99 = arith.constant 0 : index
    %c0_100 = arith.constant 0 : index
    %265 = vector.load %arg4[%c0_99, %c0_100] : memref<16x512xi32, #tpu.memory_space<vmem>>, vector<16x512xi32>
    %266 = tpu.bitcast %265 : vector<16x512xi32> -> vector<16x512xi32>
    %c29_i32 = arith.constant 29 : i32
    %267 = vector.broadcast %c29_i32 : i32 to vector<16x512xi32>
    %268 = arith.shrui %266, %267 : vector<16x512xi32>
    %269 = tpu.bitcast %268 : vector<16x512xi32> -> vector<16x512xi32>
    %270 = arith.sitofp %269 : vector<16x512xi32> to vector<16x512xf32>
    %271 = arith.truncf %270 : vector<16x512xf32> to vector<16x512xbf16>
    %c528 = arith.constant 528 : index
    %c0_101 = arith.constant 0 : index
    %272 = vector.load %arg7[%c528, %c0_101] : memref<544x512xbf16, #tpu.memory_space<vmem>>, vector<16x512xbf16>
    tpu.vector_store %arg7[%c528, %c0_101], %271 {strides = array<i32>} : memref<544x512xbf16, #tpu.memory_space<vmem>>, vector<16x512xbf16>,
    %c0_102 = arith.constant 0 : index
    %c0_103 = arith.constant 0 : index
    %273 = vector.load %arg1[%c0_102, %c0_103] : memref<1x544xbf16, #tpu.memory_space<vmem>>, vector<1x544xbf16>
    %c0_104 = arith.constant 0 : index
    %c0_105 = arith.constant 0 : index
    %274 = vector.load %arg7[%c0_104, %c0_105] : memref<544x512xbf16, #tpu.memory_space<vmem>>, vector<544x512xbf16>
    %cst_106 = arith.constant dense<0.000000e+00> : vector<1x512xf32>
    %275 = tpu.matmul %273, %274, %cst_106 {dimension_numbers = #tpu.dot_dimension_numbers<[1], [0], [0], [1], [0, 0, 1, 1], [], []>} : vector<1x544xbf16>, vector<544x512xbf16>, vector<1x512xf32> -> vector<1x512xf32>
    %276 = arith.addf %0, %275 : vector<1x512xf32>
    %c1 = arith.constant 1 : index
    %c0_107 = arith.constant 0 : index
    %277 = vector.load %arg5[%c1, %c0_107] : memref<2x512xf32, #tpu.memory_space<vmem>>, vector<1x512xf32>
    %c0_108 = arith.constant 0 : index
    %c0_109 = arith.constant 0 : index
    %278 = vector.load %arg5[%c0_108, %c0_109] : memref<2x512xf32, #tpu.memory_space<vmem>>, vector<1x512xf32>
    %279 = arith.mulf %278, %276 : vector<1x512xf32>
    %280 = arith.addf %277, %279 : vector<1x512xf32>
    %c0_110 = arith.constant 0 : index
    %c0_111 = arith.constant 0 : index
    %281 = vector.load %arg6[%c0_110, %c0_111] : memref<1x512xf32, #tpu.memory_space<vmem>>, vector<1x512xf32>
    tpu.vector_store %arg6[%c0_110, %c0_111], %280 {strides = array<i32>} : memref<1x512xf32, #tpu.memory_space<vmem>>, vector<1x512xf32>,
    return
  }
  func.func @transform_0(%arg0: i32) -> (i32, i32) {
    %c0_i32 = arith.constant 0 : i32
    %c0_i32_0 = arith.constant 0 : i32
    %c0_i32_1 = arith.constant 0 : i32
    return %c0_i32, %c0_i32_0 : i32, i32
  }
  func.func @transform_1(%arg0: i32) -> (i32, i32) {
    %c0_i32 = arith.constant 0 : i32
    %c0_i32_0 = arith.constant 0 : i32
    return %c0_i32, %arg0 : i32, i32
  }
  func.func @transform_2(%arg0: i32) -> (i32, i32) {
    %c0_i32 = arith.constant 0 : i32
    %c0_i32_0 = arith.constant 0 : i32
    return %c0_i32, %arg0 : i32, i32
  }
  func.func @transform_3(%arg0: i32) -> (i32, i32) {
    %c0_i32 = arith.constant 0 : i32
    %c0_i32_0 = arith.constant 0 : i32
    return %c0_i32, %arg0 : i32, i32
  }
  func.func @transform_4(%arg0: i32) -> (i32, i32) {
    %c0_i32 = arith.constant 0 : i32
    %c0_i32_0 = arith.constant 0 : i32
    return %c0_i32, %arg0 : i32, i32
  }
  func.func @transform_5(%arg0: i32) -> (i32, i32) {
    %c0_i32 = arith.constant 0 : i32
    %c0_i32_0 = arith.constant 0 : i32
    return %c0_i32, %arg0 : i32, i32
  }
}

</mosaic_0001>

<llo_original>
// kernel: tpu_custom_call.1
$region0: #{tpu_custom_call.1}
  #allocation0 [shape = 'u32[]', space=smem, size = 0x4, offset = 0x4, fixed_abs, tag = 'smem constant byte address 0x4 - core index']
  #allocation1 [shape = 'u32[144,128]{1,0:T(1,128)}', space=vmem, size = 0x12000, scoped, tag = 'internal scratch']
  #allocation2 [shape = 'bf16[544,512]{1,0:T(16,128)(2,1)}', space=vmem, size = 0x88000, scoped, tag = 'scratch operand']
  %s0 = inlined_call_operand.hbm [shape: bf16[1,544], index: 0, kind: input, shape index: {}]
  %s1 = inlined_call_operand.hbm [shape: s32[16,1024], index: 1, kind: input, shape index: {}]
  %s2 = inlined_call_operand.hbm [shape: s32[16,1024], index: 2, kind: input, shape index: {}]
  %s3 = inlined_call_operand.hbm [shape: s32[16,1024], index: 3, kind: input, shape index: {}]
  %s4 = inlined_call_operand.hbm [shape: f32[2,1024], index: 4, kind: input, shape index: {}]
  %s5 = inlined_call_operand.hbm [shape: f32[1,1024], index: 5, kind: output, shape index: {}]
  %s6 = sld [smem:[#allocation0]]
  $region73: #{tpu_custom_call.1} parent=0
    _
  %s8 = ssub.s32 1, %s6
  %s9 = scalar_select 0, %s8, %s6
  $region1: #{tpu_custom_call.1} parent=0
    #allocation3 [shape = 'u8[2560]{0}', space=vmem, size = 0xc00, scoped, tag = 'input window, operand 0, single buffered']
    #allocation4 [shape = 's32[2]{0}', space=sflag, size = 0x8, scoped, tag = 'scoped memory for tpu_custom_call.1']
    #allocation5 [shape = 's32[2]{0}', space=sflag, size = 0x8, scoped, tag = 'scoped memory for tpu_custom_call.1']
    #allocation6 [shape = 'u8[65536]{0}', space=vmem, size = 0x10000, scoped, tag = 'input window, operand 1']
    #allocation7 [shape = 's32[2]{0}', space=sflag, size = 0x8, scoped, tag = 'scoped memory for tpu_custom_call.1']
    #allocation8 [shape = 'u8[65536]{0}', space=vmem, size = 0x10000, scoped, tag = 'input window, operand 2']
    #allocation9 [shape = 'u8[65536]{0}', space=vmem, size = 0x10000, scoped, tag = 'input window, operand 3']
    #allocation10 [shape = 's32[2]{0}', space=sflag, size = 0x8, scoped, tag = 'scoped memory for tpu_custom_call.1']
    #allocation11 [shape = 'u8[8192]{0}', space=vmem, size = 0x2000, scoped, tag = 'input window, operand 4']
    #allocation12 [shape = 'u8[4096]{0}', space=vmem, size = 0x1000, scoped, tag = 'output window, operand 0']
    %10 = vsyncpa [#allocation4], 0
    %11 = vsyncpa [#allocation7], 0
    %s12 = scalar_lea.sflag [#allocation7], 1
    %13 = vsyncpa %s12, 0
    %14 = vsyncpa [#allocation10], 0
    %s15 = scalar_lea.sflag [#allocation10], 1
    %16 = vsyncpa %s15, 0
    %17 = vsyncpa [#allocation5], 0
    %s18 = scalar_lea.sflag [#allocation5], 1
    %19 = vsyncpa %s18, 0
    loop: start=0, step=1, limit=4
    $region2: #{tpu_custom_call.1} parent=1 // loop_pre_header
      _
    $region3: #{tpu_custom_call.1} parent=1 // loop_header
      %s21 = sphi 0, %s25
      %p22 = scmp.ge.s32.totalorder %s21, 4
      %s29 = sphi 0, %s29
      %s31 = sphi 0, %s29
      %s32 = sphi 0, %s31
      %s46 = sphi 0, %s32
      %s52 = sphi 0, %s54
      %s55 = sphi 0, %s52
      %s56 = sphi 0, %s55
      %s72 = sphi 0, %s56
      %s78 = sphi 0, %s80
      %s81 = sphi 0, %s78
      %s82 = sphi 0, %s81
      %s98 = sphi 0, %s82
      %s104 = sphi 0, %s106
      %s107 = sphi 0, %s104
      %s108 = sphi 0, %s107
      %s124 = sphi 0, %s108
      %s130 = sphi 0, %s132
      %s133 = sphi 0, %s130
      %s134 = sphi 0, %s133
      %s150 = sphi 0, %s134
      %s156 = sphi 0, %s158
      %s159 = sphi 0, %s156
      %s160 = sphi 0, %s159
      %s176 = sphi 0, %s160
    $region4: #{tpu_custom_call.1} parent=1 // loop_header_branch
      %24 = sbr.rel (%p22) target = $region8
    $region5: #{tpu_custom_call.1} parent=1 // loop_body
      %s26 = ssub.s32 %s21, 1
      %s27 = ssub.s32 %s21, 2
      %s28 = sadd.s32 %s21, 1
      %s30 = sadd.s32 %s29, 1
      %p33 = scmp.eq.s32.totalorder %s21, 1
      %p34 = scmp.ne.s32.totalorder %s29, %s31
      %p35 = scmp.eq.s32.totalorder %s21, 0
      %p36 = por %p34, %p35
      %p37 = scmp.ne.s32.totalorder %s29, %s31
      %p38 = scmp.eq.s32.totalorder %s26, 1
      %p39 = por %p37, %p38
      %p40 = scmp.ne.s32.totalorder %s31, %s32
      %p41 = scmp.eq.s32.totalorder %s26, 0
      %p42 = por %p40, %p41
      %p43 = scmp.ne.s32.totalorder %s31, %s32
      %p44 = scmp.eq.s32.totalorder %s27, 1
      %p45 = por %p43, %p44
      %p47 = scmp.ne.s32.totalorder %s32, %s46
      %p48 = scmp.eq.s32.totalorder %s27, 0
      %p49 = por %p47, %p48
      %s50 = ssub.s32 %s21, %s28
      %p51 = scmp.eq.s32.totalorder %s50, 0
      %s53 = sadd.s32 %s52, 1
      %s54 = scalar_select %p51, %s52, %s53
      %p57 = pneg %p51
      %p58 = scmp.eq.s32.totalorder %s21, 1
      %p59 = por %p57, %p58
      %p60 = scmp.ne.s32.totalorder %s52, %s55
      %p61 = scmp.eq.s32.totalorder %s21, 0
      %p62 = por %p60, %p61
      %p63 = scmp.ne.s32.totalorder %s52, %s55
      %p64 = scmp.eq.s32.totalorder %s26, 1
      %p65 = por %p63, %p64
      %p66 = scmp.ne.s32.totalorder %s55, %s56
      %p67 = scmp.eq.s32.totalorder %s26, 0
      %p68 = por %p66, %p67
      %p69 = scmp.ne.s32.totalorder %s55, %s56
      %p70 = scmp.eq.s32.totalorder %s27, 1
      %p71 = por %p69, %p70
      %p73 = scmp.ne.s32.totalorder %s56, %s72
      %p74 = scmp.eq.s32.totalorder %s27, 0
      %p75 = por %p73, %p74
      %s76 = ssub.s32 %s21, %s28
      %p77 = scmp.eq.s32.totalorder %s76, 0
      %s79 = sadd.s32 %s78, 1
      %s80 = scalar_select %p77, %s78, %s79
      %p83 = pneg %p77
      %p84 = scmp.eq.s32.totalorder %s21, 1
      %p85 = por %p83, %p84
      %p86 = scmp.ne.s32.totalorder %s78, %s81
      %p87 = scmp.eq.s32.totalorder %s21, 0
      %p88 = por %p86, %p87
      %p89 = scmp.ne.s32.totalorder %s78, %s81
      %p90 = scmp.eq.s32.totalorder %s26, 1
      %p91 = por %p89, %p90
      %p92 = scmp.ne.s32.totalorder %s81, %s82
      %p93 = scmp.eq.s32.totalorder %s26, 0
      %p94 = por %p92, %p93
      %p95 = scmp.ne.s32.totalorder %s81, %s82
      %p96 = scmp.eq.s32.totalorder %s27, 1
      %p97 = por %p95, %p96
      %p99 = scmp.ne.s32.totalorder %s82, %s98
      %p100 = scmp.eq.s32.totalorder %s27, 0
      %p101 = por %p99, %p100
      %s102 = ssub.s32 %s21, %s28
      %p103 = scmp.eq.s32.totalorder %s102, 0
      %s105 = sadd.s32 %s104, 1
      %s106 = scalar_select %p103, %s104, %s105
      %p109 = pneg %p103
      %p110 = scmp.eq.s32.totalorder %s21, 1
      %p111 = por %p109, %p110
      %p112 = scmp.ne.s32.totalorder %s104, %s107
      %p113 = scmp.eq.s32.totalorder %s21, 0
      %p114 = por %p112, %p113
      %p115 = scmp.ne.s32.totalorder %s104, %s107
      %p116 = scmp.eq.s32.totalorder %s26, 1
      %p117 = por %p115, %p116
      %p118 = scmp.ne.s32.totalorder %s107, %s108
      %p119 = scmp.eq.s32.totalorder %s26, 0
      %p120 = por %p118, %p119
      %p121 = scmp.ne.s32.totalorder %s107, %s108
      %p122 = scmp.eq.s32.totalorder %s27, 1
      %p123 = por %p121, %p122
      %p125 = scmp.ne.s32.totalorder %s108, %s124
      %p126 = scmp.eq.s32.totalorder %s27, 0
      %p127 = por %p125, %p126
      %s128 = ssub.s32 %s21, %s28
      %p129 = scmp.eq.s32.totalorder %s128, 0
      %s131 = sadd.s32 %s130, 1
      %s132 = scalar_select %p129, %s130, %s131
      %p135 = pneg %p129
      %p136 = scmp.eq.s32.totalorder %s21, 1
      %p137 = por %p135, %p136
      %p138 = scmp.ne.s32.totalorder %s130, %s133
      %p139 = scmp.eq.s32.totalorder %s21, 0
      %p140 = por %p138, %p139
      %p141 = scmp.ne.s32.totalorder %s130, %s133
      %p142 = scmp.eq.s32.totalorder %s26, 1
      %p143 = por %p141, %p142
      %p144 = scmp.ne.s32.totalorder %s133, %s134
      %p145 = scmp.eq.s32.totalorder %s26, 0
      %p146 = por %p144, %p145
      %p147 = scmp.ne.s32.totalorder %s133, %s134
      %p148 = scmp.eq.s32.totalorder %s27, 1
      %p149 = por %p147, %p148
      %p151 = scmp.ne.s32.totalorder %s134, %s150
      %p152 = scmp.eq.s32.totalorder %s27, 0
      %p153 = por %p151, %p152
      %s154 = ssub.s32 %s21, %s28
      %p155 = scmp.eq.s32.totalorder %s154, 0
      %s157 = sadd.s32 %s156, 1
      %s158 = scalar_select %p155, %s156, %s157
      %p161 = pneg %p155
      %p162 = scmp.eq.s32.totalorder %s21, 1
      %p163 = por %p161, %p162
      %p164 = scmp.ne.s32.totalorder %s156, %s159
      %p165 = scmp.eq.s32.totalorder %s21, 0
      %p166 = por %p164, %p165
      %p167 = scmp.ne.s32.totalorder %s156, %s159
      %p168 = scmp.eq.s32.totalorder %s26, 1
      %p169 = por %p167, %p168
      %p170 = scmp.ne.s32.totalorder %s159, %s160
      %p171 = scmp.eq.s32.totalorder %s26, 0
      %p172 = por %p170, %p171
      %p173 = scmp.ne.s32.totalorder %s159, %s160
      %p174 = scmp.eq.s32.totalorder %s27, 1
      %p175 = por %p173, %p174
      %p177 = scmp.ne.s32.totalorder %s160, %s176
      %p178 = scmp.eq.s32.totalorder %s27, 0
      %p179 = por %p177, %p178
      %p180 = scmp.le.s32.totalorder 1, %s21
      %p181 = scmp.lt.s32.totalorder %s21, 3
      %p182 = pnand %p180, %p181
      %p183 = pneg %p182
      // Predicated region
      $region9: #{tpu_custom_call.1} parent=5 // pred_check
        _
      $region10: #{tpu_custom_call.1} parent=5 // pred_check_branch
        %185 = sbr.rel (%p182) target = $region12
      $region11: #{tpu_custom_call.1} parent=5 // pred_region
        %s186 = ssub.s32 %s21, 1
        // Predicated region
        $region13: #{tpu_custom_call.1} parent=11 // pred_check
          %p187 = pneg %p42
        $region14: #{tpu_custom_call.1} parent=11 // pred_check_branch
          %189 = sbr.rel (%p187) target = $region16
        $region15: #{tpu_custom_call.1} parent=11 // pred_region
          %s191 = ssub.s32 80, 80
          %192 = vsyncadd [#allocation4], %s191
          %s194 = sshll.u32 [#allocation3], 4
          %s195 = int_to_ptr.vmem [resolvable:$true] %s194
          %197 = dma.hbm_to_vmem [thread:$0]  %s0, 80, %s195, [#allocation4]
        $region16: #{tpu_custom_call.1} parent=11 // pred_fallthru
          _
      $region12: #{tpu_custom_call.1} parent=5 // pred_fallthru
        _
      %p198 = scmp.lt.s32.totalorder %s21, 2
      // Predicated region
      $region17: #{tpu_custom_call.1} parent=5 // pred_check
        %p199 = pneg %p198
      $region18: #{tpu_custom_call.1} parent=5 // pred_check_branch
        %201 = sbr.rel (%p199) target = $region20
      $region19: #{tpu_custom_call.1} parent=5 // pred_region
        // Predicated region
        $region21: #{tpu_custom_call.1} parent=19 // pred_check
          %p202 = pneg %p62
        $region22: #{tpu_custom_call.1} parent=19 // pred_check_branch
          %204 = sbr.rel (%p202) target = $region24
        $region23: #{tpu_custom_call.1} parent=19 // pred_region
          %s205 = sand.u32 %s21, 1
          %s206 = scalar_lea.sflag [#allocation7], %s205
          %s207 = sand.u32 %s52, 1
          %s208 = smul.addr %s207, 64
          %s209 = scalar_lea.vmem [#allocation6], %s208
          %s210 = smul.u32 4, %s21
          %s212 = ssub.s32 1024, 1024
          %213 = vsyncadd %s206, %s212
          %s214 = smul.addr %s210, 128
          %s215 = scalar_lea.hbm %s1, %s214
          %s216 = sshll.u32 %s209, 4
          %s217 = int_to_ptr.vmem [resolvable:$true] %s216
          %222 = dma.hbm_to_vmem [thread:$0]  %s215, 1024, %s217, %s206, 1024, 512, 32
        $region24: #{tpu_custom_call.1} parent=19 // pred_fallthru
          _
        // Predicated region
        $region25: #{tpu_custom_call.1} parent=19 // pred_check
          %p223 = pneg %p88
        $region26: #{tpu_custom_call.1} parent=19 // pred_check_branch
          %225 = sbr.rel (%p223) target = $region28
        $region27: #{tpu_custom_call.1} parent=19 // pred_region
          %s226 = sand.u32 %s21, 1
          %s227 = scalar_lea.sflag [#allocation7], %s226
          %s228 = sand.u32 %s78, 1
          %s229 = smul.addr %s228, 64
          %s230 = scalar_lea.vmem [#allocation8], %s229
          %s231 = smul.u32 4, %s21
          %s233 = ssub.s32 1024, 1024
          %234 = vsyncadd %s227, %s233
          %s235 = smul.addr %s231, 128
          %s236 = scalar_lea.hbm %s2, %s235
          %s237 = sshll.u32 %s230, 4
          %s238 = int_to_ptr.vmem [resolvable:$true] %s237
          %243 = dma.hbm_to_vmem [thread:$0]  %s236, 1024, %s238, %s227, 1024, 512, 32
        $region28: #{tpu_custom_call.1} parent=19 // pred_fallthru
          _
        // Predicated region
        $region29: #{tpu_custom_call.1} parent=19 // pred_check
          %p244 = pneg %p114
        $region30: #{tpu_custom_call.1} parent=19 // pred_check_branch
          %246 = sbr.rel (%p244) target = $region32
        $region31: #{tpu_custom_call.1} parent=19 // pred_region
          %s247 = sand.u32 %s21, 1
          %s248 = scalar_lea.sflag [#allocation10], %s247
          %s249 = sand.u32 %s104, 1
          %s250 = smul.addr %s249, 64
          %s251 = scalar_lea.vmem [#allocation9], %s250
          %s252 = smul.u32 4, %s21
          %s254 = ssub.s32 1024, 1024
          %255 = vsyncadd %s248, %s254
          %s256 = smul.addr %s252, 128
          %s257 = scalar_lea.hbm %s3, %s256
          %s258 = sshll.u32 %s251, 4
          %s259 = int_to_ptr.vmem [resolvable:$true] %s258
          %264 = dma.hbm_to_vmem [thread:$0]  %s257, 1024, %s259, %s248, 1024, 512, 32
        $region32: #{tpu_custom_call.1} parent=19 // pred_fallthru
          _
        // Predicated region
        $region33: #{tpu_custom_call.1} parent=19 // pred_check
          %p265 = pneg %p140
        $region34: #{tpu_custom_call.1} parent=19 // pred_check_branch
          %267 = sbr.rel (%p265) target = $region36
        $region35: #{tpu_custom_call.1} parent=19 // pred_region
          %s268 = sand.u32 %s21, 1
          %s269 = scalar_lea.sflag [#allocation10], %s268
          %s270 = sand.u32 %s130, 1
          %s271 = smul.addr %s270, 8
          %s272 = scalar_lea.vmem [#allocation11], %s271
          %s273 = smul.u32 4, %s21
          %s275 = ssub.s32 128, 128
          %276 = vsyncadd %s269, %s275
          %s277 = smul.addr %s273, 32
          %s278 = scalar_lea.hbm %s4, %s277
          %s280 = sshll.u32 %s272, 4
          %s281 = int_to_ptr.vmem [resolvable:$true] %s280
          %283 = dma.hbm_to_vmem [thread:$0]  %s278, 128, %s281, %s269
        $region36: #{tpu_custom_call.1} parent=19 // pred_fallthru
          _
      $region20: #{tpu_custom_call.1} parent=5 // pred_fallthru
        _
      %p284 = scmp.le.s32.totalorder 1, %s21
      %p285 = scmp.lt.s32.totalorder %s21, 3
      %p286 = pnand %p284, %p285
      %p287 = pneg %p286
      // Predicated region
      $region37: #{tpu_custom_call.1} parent=5 // pred_check
        _
      $region38: #{tpu_custom_call.1} parent=5 // pred_check_branch
        %289 = sbr.rel (%p286) target = $region40
      $region39: #{tpu_custom_call.1} parent=5 // pred_region
        %s290 = ssub.s32 %s21, 1
        // Predicated region
        $region41: #{tpu_custom_call.1} parent=39 // pred_check
          %p291 = pneg %p42
        $region42: #{tpu_custom_call.1} parent=39 // pred_check_branch
          %293 = sbr.rel (%p291) target = $region44
        $region43: #{tpu_custom_call.1} parent=39 // pred_region
          %294 = dma.done [#allocation4], 80
        $region44: #{tpu_custom_call.1} parent=39 // pred_fallthru
          _
        %s295 = sand.u32 %s26, 1
        %s296 = scalar_lea.sflag [#allocation7], %s295
        %s297 = sand.u32 %s55, 1
        %s298 = smul.addr %s297, 64
        %s299 = scalar_lea.vmem [#allocation6], %s298
        // Predicated region
        $region45: #{tpu_custom_call.1} parent=39 // pred_check
          %p300 = pneg %p68
        $region46: #{tpu_custom_call.1} parent=39 // pred_check_branch
          %302 = sbr.rel (%p300) target = $region48
        $region47: #{tpu_custom_call.1} parent=39 // pred_region
          %303 = dma.done %s296, 1024
        $region48: #{tpu_custom_call.1} parent=39 // pred_fallthru
          _
        %s304 = sand.u32 %s26, 1
        %s305 = scalar_lea.sflag [#allocation7], %s304
        %s306 = sand.u32 %s81, 1
        %s307 = smul.addr %s306, 64
        %s308 = scalar_lea.vmem [#allocation8], %s307
        // Predicated region
        $region49: #{tpu_custom_call.1} parent=39 // pred_check
          %p309 = pneg %p94
        $region50: #{tpu_custom_call.1} parent=39 // pred_check_branch
          %311 = sbr.rel (%p309) target = $region52
        $region51: #{tpu_custom_call.1} parent=39 // pred_region
          %312 = dma.done %s305, 1024
        $region52: #{tpu_custom_call.1} parent=39 // pred_fallthru
          _
        %s313 = sand.u32 %s26, 1
        %s314 = scalar_lea.sflag [#allocation10], %s313
        %s315 = sand.u32 %s107, 1
        %s316 = smul.addr %s315, 64
        %s317 = scalar_lea.vmem [#allocation9], %s316
        // Predicated region
        $region53: #{tpu_custom_call.1} parent=39 // pred_check
          %p318 = pneg %p120
        $region54: #{tpu_custom_call.1} parent=39 // pred_check_branch
          %320 = sbr.rel (%p318) target = $region56
        $region55: #{tpu_custom_call.1} parent=39 // pred_region
          %321 = dma.done %s314, 1024
        $region56: #{tpu_custom_call.1} parent=39 // pred_fallthru
          _
        %s322 = sand.u32 %s26, 1
        %s323 = scalar_lea.sflag [#allocation10], %s322
        %s324 = sand.u32 %s133, 1
        %s325 = smul.addr %s324, 8
        %s326 = scalar_lea.vmem [#allocation11], %s325
        // Predicated region
        $region57: #{tpu_custom_call.1} parent=39 // pred_check
          %p327 = pneg %p146
        $region58: #{tpu_custom_call.1} parent=39 // pred_check_branch
          %329 = sbr.rel (%p327) target = $region60
        $region59: #{tpu_custom_call.1} parent=39 // pred_region
          %330 = dma.done %s323, 128
        $region60: #{tpu_custom_call.1} parent=39 // pred_fallthru
          _
        %p331 = pneg %p42
        %p332 = pneg %p39
        %s333 = sand.u32 %s26, 1
        %s334 = scalar_lea.sflag [#allocation7], %s333
        %s335 = sand.u32 %s55, 1
        %s336 = smul.addr %s335, 64
        %s337 = scalar_lea.vmem [#allocation6], %s336
        %p338 = pneg %p68
        %p339 = pneg %p65
        %s340 = sand.u32 %s26, 1
        %s341 = scalar_lea.sflag [#allocation7], %s340
        %s342 = sand.u32 %s81, 1
        %s343 = smul.addr %s342, 64
        %s344 = scalar_lea.vmem [#allocation8], %s343
        %p345 = pneg %p94
        %p346 = pneg %p91
        %s347 = sand.u32 %s26, 1
        %s348 = scalar_lea.sflag [#allocation10], %s347
        %s349 = sand.u32 %s107, 1
        %s350 = smul.addr %s349, 64
        %s351 = scalar_lea.vmem [#allocation9], %s350
        %p352 = pneg %p120
        %p353 = pneg %p117
        %s354 = sand.u32 %s26, 1
        %s355 = scalar_lea.sflag [#allocation10], %s354
        %s356 = sand.u32 %s133, 1
        %s357 = smul.addr %s356, 8
        %s358 = scalar_lea.vmem [#allocation11], %s357
        %p359 = pneg %p146
        %p360 = pneg %p143
        %p361 = pneg %p172
        %p362 = pneg %p169
        %s363 = sand.u32 %s159, 1
        %s364 = scalar_lea.sflag [#allocation5], %s363
        %s365 = sand.u32 %s159, 1
        %s366 = smul.addr %s365, 4
        %s367 = scalar_lea.vmem [#allocation12], %s366
        %s368 = smul.u32 4, %s26
        %s369 = smul.u32 4, %s26
        %s370 = smul.u32 4, %s26
        %s371 = smul.u32 4, %s26
        %s372 = smul.u32 4, %s26
        %v374 = vld [vmem:[%s299] sm:$0xff]
        %v375 = vld [vmem:[%s299 + $0x8] sm:$0xff]
        %v376 = vld [vmem:[%s299 + $0x10] sm:$0xff]
        %v377 = vld [vmem:[%s299 + $0x18] sm:$0xff]
        %v378 = vld [vmem:[%s299 + $0x20] sm:$0xff]
        %v379 = vld [vmem:[%s299 + $0x28] sm:$0xff]
        %v380 = vld [vmem:[%s299 + $0x30] sm:$0xff]
        %v381 = vld [vmem:[%s299 + $0x38] sm:$0xff]
        %v382 = vand.u32 %v374, 7
        %v383 = vand.u32 %v375, 7
        %v384 = vand.u32 %v376, 7
        %v385 = vand.u32 %v377, 7
        %v386 = vand.u32 %v378, 7
        %v387 = vand.u32 %v379, 7
        %v388 = vand.u32 %v380, 7
        %v389 = vand.u32 %v381, 7
        %v390 = vcvt.s32.f32 %v382
        %v391 = vcvt.s32.f32 %v383
        %v392 = vcvt.s32.f32 %v384
        %v393 = vcvt.s32.f32 %v385
        %v394 = vcvt.s32.f32 %v386
        %v395 = vcvt.s32.f32 %v387
        %v396 = vcvt.s32.f32 %v388
        %v397 = vcvt.s32.f32 %v389
        %v398 = vpack.c.bf16 %v394, %v390
        %v399 = vpack.c.bf16 %v395, %v391
        %v400 = vpack.c.bf16 %v396, %v392
        %v401 = vpack.c.bf16 %v397, %v393
        %402 = vst [vmem:[#allocation2] sm:$0xff] %v398
        %403 = vst [vmem:[#allocation2 + $0x8] sm:$0xff] %v399
        %404 = vst [vmem:[#allocation2 + $0x10] sm:$0xff] %v400
        %405 = vst [vmem:[#allocation2 + $0x18] sm:$0xff] %v401
        %v406 = vld [vmem:[%s299] sm:$0xff]
        %v407 = vld [vmem:[%s299 + $0x8] sm:$0xff]
        %v408 = vld [vmem:[%s299 + $0x10] sm:$0xff]
        %v409 = vld [vmem:[%s299 + $0x18] sm:$0xff]
        %v410 = vld [vmem:[%s299 + $0x20] sm:$0xff]
        %v411 = vld [vmem:[%s299 + $0x28] sm:$0xff]
        %v412 = vld [vmem:[%s299 + $0x30] sm:$0xff]
        %v413 = vld [vmem:[%s299 + $0x38] sm:$0xff]
        %v414 = vand.u32 %v406, 56
        %v415 = vand.u32 %v407, 56
        %v416 = vand.u32 %v408, 56
        %v417 = vand.u32 %v409, 56
        %v418 = vand.u32 %v410, 56
        %v419 = vand.u32 %v411, 56
        %v420 = vand.u32 %v412, 56
        %v421 = vand.u32 %v413, 56
        %v422 = vcvt.s32.f32 %v414
        %v423 = vcvt.s32.f32 %v415
        %v424 = vcvt.s32.f32 %v416
        %v425 = vcvt.s32.f32 %v417
        %v426 = vcvt.s32.f32 %v418
        %v427 = vcvt.s32.f32 %v419
        %v428 = vcvt.s32.f32 %v420
        %v429 = vcvt.s32.f32 %v421
        %v430 = vpack.c.bf16 %v426, %v422
        %v431 = vpack.c.bf16 %v427, %v423
        %v432 = vpack.c.bf16 %v428, %v424
        %v433 = vpack.c.bf16 %v429, %v425
        %434 = vst [vmem:[#allocation2 + $0x20] sm:$0xff] %v430
        %435 = vst [vmem:[#allocation2 + $0x28] sm:$0xff] %v431
        %436 = vst [vmem:[#allocation2 + $0x30] sm:$0xff] %v432
        %437 = vst [vmem:[#allocation2 + $0x38] sm:$0xff] %v433
        %v438 = vld [vmem:[%s299] sm:$0xff]
        %v439 = vld [vmem:[%s299 + $0x8] sm:$0xff]
        %v440 = vld [vmem:[%s299 + $0x10] sm:$0xff]
        %v441 = vld [vmem:[%s299 + $0x18] sm:$0xff]
        %v442 = vld [vmem:[%s299 + $0x20] sm:$0xff]
        %v443 = vld [vmem:[%s299 + $0x28] sm:$0xff]
        %v444 = vld [vmem:[%s299 + $0x30] sm:$0xff]
        %v445 = vld [vmem:[%s299 + $0x38] sm:$0xff]
        %v446 = vand.u32 %v438, 448
        %v447 = vand.u32 %v439, 448
        %v448 = vand.u32 %v440, 448
        %v449 = vand.u32 %v441, 448
        %v450 = vand.u32 %v442, 448
        %v451 = vand.u32 %v443, 448
        %v452 = vand.u32 %v444, 448
        %v453 = vand.u32 %v445, 448
        %v454 = vcvt.s32.f32 %v446
        %v455 = vcvt.s32.f32 %v447
        %v456 = vcvt.s32.f32 %v448
        %v457 = vcvt.s32.f32 %v449
        %v458 = vcvt.s32.f32 %v450
        %v459 = vcvt.s32.f32 %v451
        %v460 = vcvt.s32.f32 %v452
        %v461 = vcvt.s32.f32 %v453
        %v462 = vpack.c.bf16 %v458, %v454
        %v463 = vpack.c.bf16 %v459, %v455
        %v464 = vpack.c.bf16 %v460, %v456
        %v465 = vpack.c.bf16 %v461, %v457
        %466 = vst [vmem:[#allocation2 + $0x40] sm:$0xff] %v462
        %467 = vst [vmem:[#allocation2 + $0x48] sm:$0xff] %v463
        %468 = vst [vmem:[#allocation2 + $0x50] sm:$0xff] %v464
        %469 = vst [vmem:[#allocation2 + $0x58] sm:$0xff] %v465
        %v470 = vld [vmem:[%s299] sm:$0xff]
        %v471 = vld [vmem:[%s299 + $0x8] sm:$0xff]
        %v472 = vld [vmem:[%s299 + $0x10] sm:$0xff]
        %v473 = vld [vmem:[%s299 + $0x18] sm:$0xff]
        %v474 = vld [vmem:[%s299 + $0x20] sm:$0xff]
        %v475 = vld [vmem:[%s299 + $0x28] sm:$0xff]
        %v476 = vld [vmem:[%s299 + $0x30] sm:$0xff]
        %v477 = vld [vmem:[%s299 + $0x38] sm:$0xff]
        %v478 = vand.u32 %v470, 3584
        %v479 = vand.u32 %v471, 3584
        %v480 = vand.u32 %v472, 3584
        %v481 = vand.u32 %v473, 3584
        %v482 = vand.u32 %v474, 3584
        %v483 = vand.u32 %v475, 3584
        %v484 = vand.u32 %v476, 3584
        %v485 = vand.u32 %v477, 3584
        %v486 = vcvt.s32.f32 %v478
        %v487 = vcvt.s32.f32 %v479
        %v488 = vcvt.s32.f32 %v480
        %v489 = vcvt.s32.f32 %v481
        %v490 = vcvt.s32.f32 %v482
        %v491 = vcvt.s32.f32 %v483
        %v492 = vcvt.s32.f32 %v484
        %v493 = vcvt.s32.f32 %v485
        %v494 = vpack.c.bf16 %v490, %v486
        %v495 = vpack.c.bf16 %v491, %v487
        %v496 = vpack.c.bf16 %v492, %v488
        %v497 = vpack.c.bf16 %v493, %v489
        %498 = vst [vmem:[#allocation2 + $0x60] sm:$0xff] %v494
        %499 = vst [vmem:[#allocation2 + $0x68] sm:$0xff] %v495
        %500 = vst [vmem:[#allocation2 + $0x70] sm:$0xff] %v496
        %501 = vst [vmem:[#allocation2 + $0x78] sm:$0xff] %v497
        %v502 = vld [vmem:[%s299] sm:$0xff]
        %v503 = vld [vmem:[%s299 + $0x8] sm:$0xff]
        %v504 = vld [vmem:[%s299 + $0x10] sm:$0xff]
        %v505 = vld [vmem:[%s299 + $0x18] sm:$0xff]
        %v506 = vld [vmem:[%s299 + $0x20] sm:$0xff]
        %v507 = vld [vmem:[%s299 + $0x28] sm:$0xff]
        %v508 = vld [vmem:[%s299 + $0x30] sm:$0xff]
        %v509 = vld [vmem:[%s299 + $0x38] sm:$0xff]
        %v510 = vand.u32 %v502, 28672
        %v511 = vand.u32 %v503, 28672
        %v512 = vand.u32 %v504, 28672
        %v513 = vand.u32 %v505, 28672
        %v514 = vand.u32 %v506, 28672
        %v515 = vand.u32 %v507, 28672
        %v516 = vand.u32 %v508, 28672
        %v517 = vand.u32 %v509, 28672
        %v518 = vcvt.s32.f32 %v510
        %v519 = vcvt.s32.f32 %v511
        %v520 = vcvt.s32.f32 %v512
        %v521 = vcvt.s32.f32 %v513
        %v522 = vcvt.s32.f32 %v514
        %v523 = vcvt.s32.f32 %v515
        %v524 = vcvt.s32.f32 %v516
        %v525 = vcvt.s32.f32 %v517
        %v526 = vpack.c.bf16 %v522, %v518
        %v527 = vpack.c.bf16 %v523, %v519
        %v528 = vpack.c.bf16 %v524, %v520
        %v529 = vpack.c.bf16 %v525, %v521
        %530 = vst [vmem:[#allocation2 + $0x80] sm:$0xff] %v526
        %531 = vst [vmem:[#allocation2 + $0x88] sm:$0xff] %v527
        %532 = vst [vmem:[#allocation2 + $0x90] sm:$0xff] %v528
        %533 = vst [vmem:[#allocation2 + $0x98] sm:$0xff] %v529
        %v534 = vld [vmem:[%s299] sm:$0xff]
        %v535 = vld [vmem:[%s299 + $0x8] sm:$0xff]
        %v536 = vld [vmem:[%s299 + $0x10] sm:$0xff]
        %v537 = vld [vmem:[%s299 + $0x18] sm:$0xff]
        %v538 = vld [vmem:[%s299 + $0x20] sm:$0xff]
        %v539 = vld [vmem:[%s299 + $0x28] sm:$0xff]
        %v540 = vld [vmem:[%s299 + $0x30] sm:$0xff]
        %v541 = vld [vmem:[%s299 + $0x38] sm:$0xff]
        %v542 = vand.u32 %v534, 229376
        %v543 = vand.u32 %v535, 229376
        %v544 = vand.u32 %v536, 229376
        %v545 = vand.u32 %v537, 229376
        %v546 = vand.u32 %v538, 229376
        %v547 = vand.u32 %v539, 229376
        %v548 = vand.u32 %v540, 229376
        %v549 = vand.u32 %v541, 229376
        %v550 = vcvt.s32.f32 %v542
        %v551 = vcvt.s32.f32 %v543
        %v552 = vcvt.s32.f32 %v544
        %v553 = vcvt.s32.f32 %v545
        %v554 = vcvt.s32.f32 %v546
        %v555 = vcvt.s32.f32 %v547
        %v556 = vcvt.s32.f32 %v548
        %v557 = vcvt.s32.f32 %v549
        %v558 = vpack.c.bf16 %v554, %v550
        %v559 = vpack.c.bf16 %v555, %v551
        %v560 = vpack.c.bf16 %v556, %v552
        %v561 = vpack.c.bf16 %v557, %v553
        %562 = vst [vmem:[#allocation2 + $0xa0] sm:$0xff] %v558
        %563 = vst [vmem:[#allocation2 + $0xa8] sm:$0xff] %v559
        %564 = vst [vmem:[#allocation2 + $0xb0] sm:$0xff] %v560
        %565 = vst [vmem:[#allocation2 + $0xb8] sm:$0xff] %v561
        %v566 = vld [vmem:[%s299] sm:$0xff]
        %v567 = vld [vmem:[%s299 + $0x8] sm:$0xff]
        %v568 = vld [vmem:[%s299 + $0x10] sm:$0xff]
        %v569 = vld [vmem:[%s299 + $0x18] sm:$0xff]
        %v570 = vld [vmem:[%s299 + $0x20] sm:$0xff]
        %v571 = vld [vmem:[%s299 + $0x28] sm:$0xff]
        %v572 = vld [vmem:[%s299 + $0x30] sm:$0xff]
        %v573 = vld [vmem:[%s299 + $0x38] sm:$0xff]
        %v574 = vand.u32 %v566, 1835008
        %v575 = vand.u32 %v567, 1835008
        %v576 = vand.u32 %v568, 1835008
        %v577 = vand.u32 %v569, 1835008
        %v578 = vand.u32 %v570, 1835008
        %v579 = vand.u32 %v571, 1835008
        %v580 = vand.u32 %v572, 1835008
        %v581 = vand.u32 %v573, 1835008
        %v582 = vcvt.s32.f32 %v574
        %v583 = vcvt.s32.f32 %v575
        %v584 = vcvt.s32.f32 %v576
        %v585 = vcvt.s32.f32 %v577
        %v586 = vcvt.s32.f32 %v578
        %v587 = vcvt.s32.f32 %v579
        %v588 = vcvt.s32.f32 %v580
        %v589 = vcvt.s32.f32 %v581
        %v590 = vpack.c.bf16 %v586, %v582
        %v591 = vpack.c.bf16 %v587, %v583
        %v592 = vpack.c.bf16 %v588, %v584
        %v593 = vpack.c.bf16 %v589, %v585
        %594 = vst [vmem:[#allocation2 + $0xc0] sm:$0xff] %v590
        %595 = vst [vmem:[#allocation2 + $0xc8] sm:$0xff] %v591
        %596 = vst [vmem:[#allocation2 + $0xd0] sm:$0xff] %v592
        %597 = vst [vmem:[#allocation2 + $0xd8] sm:$0xff] %v593
        %v598 = vld [vmem:[%s299] sm:$0xff]
        %v599 = vld [vmem:[%s299 + $0x8] sm:$0xff]
        %v600 = vld [vmem:[%s299 + $0x10] sm:$0xff]
        %v601 = vld [vmem:[%s299 + $0x18] sm:$0xff]
        %v602 = vld [vmem:[%s299 + $0x20] sm:$0xff]
        %v603 = vld [vmem:[%s299 + $0x28] sm:$0xff]
        %v604 = vld [vmem:[%s299 + $0x30] sm:$0xff]
        %v605 = vld [vmem:[%s299 + $0x38] sm:$0xff]
        %v606 = vand.u32 %v598, 14680064
        %v607 = vand.u32 %v599, 14680064
        %v608 = vand.u32 %v600, 14680064
        %v609 = vand.u32 %v601, 14680064
        %v610 = vand.u32 %v602, 14680064
        %v611 = vand.u32 %v603, 14680064
        %v612 = vand.u32 %v604, 14680064
        %v613 = vand.u32 %v605, 14680064
        %v614 = vcvt.s32.f32 %v606
        %v615 = vcvt.s32.f32 %v607
        %v616 = vcvt.s32.f32 %v608
        %v617 = vcvt.s32.f32 %v609
        %v618 = vcvt.s32.f32 %v610
        %v619 = vcvt.s32.f32 %v611
        %v620 = vcvt.s32.f32 %v612
        %v621 = vcvt.s32.f32 %v613
        %v622 = vpack.c.bf16 %v618, %v614
        %v623 = vpack.c.bf16 %v619, %v615
        %v624 = vpack.c.bf16 %v620, %v616
        %v625 = vpack.c.bf16 %v621, %v617
        %626 = vst [vmem:[#allocation2 + $0xe0] sm:$0xff] %v622
        %627 = vst [vmem:[#allocation2 + $0xe8] sm:$0xff] %v623
        %628 = vst [vmem:[#allocation2 + $0xf0] sm:$0xff] %v624
        %629 = vst [vmem:[#allocation2 + $0xf8] sm:$0xff] %v625
        %v630 = vld [vmem:[%s299] sm:$0xff]
        %v631 = vld [vmem:[%s299 + $0x8] sm:$0xff]
        %v632 = vld [vmem:[%s299 + $0x10] sm:$0xff]
        %v633 = vld [vmem:[%s299 + $0x18] sm:$0xff]
        %v634 = vld [vmem:[%s299 + $0x20] sm:$0xff]
        %v635 = vld [vmem:[%s299 + $0x28] sm:$0xff]
        %v636 = vld [vmem:[%s299 + $0x30] sm:$0xff]
        %v637 = vld [vmem:[%s299 + $0x38] sm:$0xff]
        %v638 = vand.u32 %v630, 117440512
        %v639 = vand.u32 %v631, 117440512
        %v640 = vand.u32 %v632, 117440512
        %v641 = vand.u32 %v633, 117440512
        %v642 = vand.u32 %v634, 117440512
        %v643 = vand.u32 %v635, 117440512
        %v644 = vand.u32 %v636, 117440512
        %v645 = vand.u32 %v637, 117440512
        %v646 = vcvt.s32.f32 %v638
        %v647 = vcvt.s32.f32 %v639
        %v648 = vcvt.s32.f32 %v640
        %v649 = vcvt.s32.f32 %v641
        %v650 = vcvt.s32.f32 %v642
        %v651 = vcvt.s32.f32 %v643
        %v652 = vcvt.s32.f32 %v644
        %v653 = vcvt.s32.f32 %v645
        %v654 = vpack.c.bf16 %v650, %v646
        %v655 = vpack.c.bf16 %v651, %v647
        %v656 = vpack.c.bf16 %v652, %v648
        %v657 = vpack.c.bf16 %v653, %v649
        %658 = vst [vmem:[#allocation2 + $0x100] sm:$0xff] %v654
        %659 = vst [vmem:[#allocation2 + $0x108] sm:$0xff] %v655
        %660 = vst [vmem:[#allocation2 + $0x110] sm:$0xff] %v656
        %661 = vst [vmem:[#allocation2 + $0x118] sm:$0xff] %v657
        %v662 = vld [vmem:[%s299] sm:$0xff]
        %v663 = vld [vmem:[%s299 + $0x8] sm:$0xff]
        %v664 = vld [vmem:[%s299 + $0x10] sm:$0xff]
        %v665 = vld [vmem:[%s299 + $0x18] sm:$0xff]
        %v666 = vld [vmem:[%s299 + $0x20] sm:$0xff]
        %v667 = vld [vmem:[%s299 + $0x28] sm:$0xff]
        %v668 = vld [vmem:[%s299 + $0x30] sm:$0xff]
        %v669 = vld [vmem:[%s299 + $0x38] sm:$0xff]
        %v670 = vand.u32 %v662, 939524096
        %v671 = vand.u32 %v663, 939524096
        %v672 = vand.u32 %v664, 939524096
        %v673 = vand.u32 %v665, 939524096
        %v674 = vand.u32 %v666, 939524096
        %v675 = vand.u32 %v667, 939524096
        %v676 = vand.u32 %v668, 939524096
        %v677 = vand.u32 %v669, 939524096
        %v678 = vcvt.s32.f32 %v670
        %v679 = vcvt.s32.f32 %v671
        %v680 = vcvt.s32.f32 %v672
        %v681 = vcvt.s32.f32 %v673
        %v682 = vcvt.s32.f32 %v674
        %v683 = vcvt.s32.f32 %v675
        %v684 = vcvt.s32.f32 %v676
        %v685 = vcvt.s32.f32 %v677
        %v686 = vpack.c.bf16 %v682, %v678
        %v687 = vpack.c.bf16 %v683, %v679
        %v688 = vpack.c.bf16 %v684, %v680
        %v689 = vpack.c.bf16 %v685, %v681
        %690 = vst [vmem:[#allocation2 + $0x120] sm:$0xff] %v686
        %691 = vst [vmem:[#allocation2 + $0x128] sm:$0xff] %v687
        %692 = vst [vmem:[#allocation2 + $0x130] sm:$0xff] %v688
        %693 = vst [vmem:[#allocation2 + $0x138] sm:$0xff] %v689
        %v694 = vld [vmem:[%s299] sm:$0xff]
        %v695 = vld [vmem:[%s299 + $0x8] sm:$0xff]
        %v696 = vld [vmem:[%s299 + $0x10] sm:$0xff]
        %v697 = vld [vmem:[%s299 + $0x18] sm:$0xff]
        %v698 = vld [vmem:[%s299 + $0x20] sm:$0xff]
        %v699 = vld [vmem:[%s299 + $0x28] sm:$0xff]
        %v700 = vld [vmem:[%s299 + $0x30] sm:$0xff]
        %v701 = vld [vmem:[%s299 + $0x38] sm:$0xff]
        %v702 = vshrl.u32 %v694, 30
        %v703 = vshrl.u32 %v695, 30
        %v704 = vshrl.u32 %v696, 30
        %v705 = vshrl.u32 %v697, 30
        %v706 = vshrl.u32 %v698, 30
        %v707 = vshrl.u32 %v699, 30
        %v708 = vshrl.u32 %v700, 30
        %v709 = vshrl.u32 %v701, 30
        %v710 = vcvt.s32.f32 %v702
        %v711 = vcvt.s32.f32 %v703
        %v712 = vcvt.s32.f32 %v704
        %v713 = vcvt.s32.f32 %v705
        %v714 = vcvt.s32.f32 %v706
        %v715 = vcvt.s32.f32 %v707
        %v716 = vcvt.s32.f32 %v708
        %v717 = vcvt.s32.f32 %v709
        %v718 = vpack.c.bf16 %v714, %v710
        %v719 = vpack.c.bf16 %v715, %v711
        %v720 = vpack.c.bf16 %v716, %v712
        %v721 = vpack.c.bf16 %v717, %v713
        %722 = vst [vmem:[#allocation2 + $0x140] sm:$0xff] %v718
        %723 = vst [vmem:[#allocation2 + $0x148] sm:$0xff] %v719
        %724 = vst [vmem:[#allocation2 + $0x150] sm:$0xff] %v720
        %725 = vst [vmem:[#allocation2 + $0x158] sm:$0xff] %v721
        %v726 = vld [vmem:[%s308] sm:$0xff]
        %v727 = vld [vmem:[%s308 + $0x8] sm:$0xff]
        %v728 = vld [vmem:[%s308 + $0x10] sm:$0xff]
        %v729 = vld [vmem:[%s308 + $0x18] sm:$0xff]
        %v730 = vld [vmem:[%s308 + $0x20] sm:$0xff]
        %v731 = vld [vmem:[%s308 + $0x28] sm:$0xff]
        %v732 = vld [vmem:[%s308 + $0x30] sm:$0xff]
        %v733 = vld [vmem:[%s308 + $0x38] sm:$0xff]
        %v734 = vand.u32 %v726, 1
        %v735 = vand.u32 %v727, 1
        %v736 = vand.u32 %v728, 1
        %v737 = vand.u32 %v729, 1
        %v738 = vand.u32 %v730, 1
        %v739 = vand.u32 %v731, 1
        %v740 = vand.u32 %v732, 1
        %v741 = vand.u32 %v733, 1
        %v742 = vcvt.s32.f32 %v734
        %v743 = vcvt.s32.f32 %v735
        %v744 = vcvt.s32.f32 %v736
        %v745 = vcvt.s32.f32 %v737
        %v746 = vcvt.s32.f32 %v738
        %v747 = vcvt.s32.f32 %v739
        %v748 = vcvt.s32.f32 %v740
        %v749 = vcvt.s32.f32 %v741
        %v750 = vpack.c.bf16 %v746, %v742
        %v751 = vpack.c.bf16 %v747, %v743
        %v752 = vpack.c.bf16 %v748, %v744
        %v753 = vpack.c.bf16 %v749, %v745
        %754 = vst [vmem:[#allocation2 + $0x160] sm:$0xff] %v750
        %755 = vst [vmem:[#allocation2 + $0x168] sm:$0xff] %v751
        %756 = vst [vmem:[#allocation2 + $0x170] sm:$0xff] %v752
        %757 = vst [vmem:[#allocation2 + $0x178] sm:$0xff] %v753
        %v758 = vld [vmem:[%s308] sm:$0xff]
        %v759 = vld [vmem:[%s308 + $0x8] sm:$0xff]
        %v760 = vld [vmem:[%s308 + $0x10] sm:$0xff]
        %v761 = vld [vmem:[%s308 + $0x18] sm:$0xff]
        %v762 = vld [vmem:[%s308 + $0x20] sm:$0xff]
        %v763 = vld [vmem:[%s308 + $0x28] sm:$0xff]
        %v764 = vld [vmem:[%s308 + $0x30] sm:$0xff]
        %v765 = vld [vmem:[%s308 + $0x38] sm:$0xff]
        %v766 = vand.u32 %v758, 14
        %v767 = vand.u32 %v759, 14
        %v768 = vand.u32 %v760, 14
        %v769 = vand.u32 %v761, 14
        %v770 = vand.u32 %v762, 14
        %v771 = vand.u32 %v763, 14
        %v772 = vand.u32 %v764, 14
        %v773 = vand.u32 %v765, 14
        %v774 = vcvt.s32.f32 %v766
        %v775 = vcvt.s32.f32 %v767
        %v776 = vcvt.s32.f32 %v768
        %v777 = vcvt.s32.f32 %v769
        %v778 = vcvt.s32.f32 %v770
        %v779 = vcvt.s32.f32 %v771
        %v780 = vcvt.s32.f32 %v772
        %v781 = vcvt.s32.f32 %v773
        %v782 = vpack.c.bf16 %v778, %v774
        %v783 = vpack.c.bf16 %v779, %v775
        %v784 = vpack.c.bf16 %v780, %v776
        %v785 = vpack.c.bf16 %v781, %v777
        %786 = vst [vmem:[#allocation2 + $0x180] sm:$0xff] %v782
        %787 = vst [vmem:[#allocation2 + $0x188] sm:$0xff] %v783
        %788 = vst [vmem:[#allocation2 + $0x190] sm:$0xff] %v784
        %789 = vst [vmem:[#allocation2 + $0x198] sm:$0xff] %v785
        %v790 = vld [vmem:[%s308] sm:$0xff]
        %v791 = vld [vmem:[%s308 + $0x8] sm:$0xff]
        %v792 = vld [vmem:[%s308 + $0x10] sm:$0xff]
        %v793 = vld [vmem:[%s308 + $0x18] sm:$0xff]
        %v794 = vld [vmem:[%s308 + $0x20] sm:$0xff]
        %v795 = vld [vmem:[%s308 + $0x28] sm:$0xff]
        %v796 = vld [vmem:[%s308 + $0x30] sm:$0xff]
        %v797 = vld [vmem:[%s308 + $0x38] sm:$0xff]
        %v798 = vand.u32 %v790, 112
        %v799 = vand.u32 %v791, 112
        %v800 = vand.u32 %v792, 112
        %v801 = vand.u32 %v793, 112
        %v802 = vand.u32 %v794, 112
        %v803 = vand.u32 %v795, 112
        %v804 = vand.u32 %v796, 112
        %v805 = vand.u32 %v797, 112
        %v806 = vcvt.s32.f32 %v798
        %v807 = vcvt.s32.f32 %v799
        %v808 = vcvt.s32.f32 %v800
        %v809 = vcvt.s32.f32 %v801
        %v810 = vcvt.s32.f32 %v802
        %v811 = vcvt.s32.f32 %v803
        %v812 = vcvt.s32.f32 %v804
        %v813 = vcvt.s32.f32 %v805
        %v814 = vpack.c.bf16 %v810, %v806
        %v815 = vpack.c.bf16 %v811, %v807
        %v816 = vpack.c.bf16 %v812, %v808
        %v817 = vpack.c.bf16 %v813, %v809
        %818 = vst [vmem:[#allocation2 + $0x1a0] sm:$0xff] %v814
        %819 = vst [vmem:[#allocation2 + $0x1a8] sm:$0xff] %v815
        %820 = vst [vmem:[#allocation2 + $0x1b0] sm:$0xff] %v816
        %821 = vst [vmem:[#allocation2 + $0x1b8] sm:$0xff] %v817
        %v822 = vld [vmem:[%s308] sm:$0xff]
        %v823 = vld [vmem:[%s308 + $0x8] sm:$0xff]
        %v824 = vld [vmem:[%s308 + $0x10] sm:$0xff]
        %v825 = vld [vmem:[%s308 + $0x18] sm:$0xff]
        %v826 = vld [vmem:[%s308 + $0x20] sm:$0xff]
        %v827 = vld [vmem:[%s308 + $0x28] sm:$0xff]
        %v828 = vld [vmem:[%s308 + $0x30] sm:$0xff]
        %v829 = vld [vmem:[%s308 + $0x38] sm:$0xff]
        %v830 = vand.u32 %v822, 896
        %v831 = vand.u32 %v823, 896
        %v832 = vand.u32 %v824, 896
        %v833 = vand.u32 %v825, 896
        %v834 = vand.u32 %v826, 896
        %v835 = vand.u32 %v827, 896
        %v836 = vand.u32 %v828, 896
        %v837 = vand.u32 %v829, 896
        %v838 = vcvt.s32.f32 %v830
        %v839 = vcvt.s32.f32 %v831
        %v840 = vcvt.s32.f32 %v832
        %v841 = vcvt.s32.f32 %v833
        %v842 = vcvt.s32.f32 %v834
        %v843 = vcvt.s32.f32 %v835
        %v844 = vcvt.s32.f32 %v836
        %v845 = vcvt.s32.f32 %v837
        %v846 = vpack.c.bf16 %v842, %v838
        %v847 = vpack.c.bf16 %v843, %v839
        %v848 = vpack.c.bf16 %v844, %v840
        %v849 = vpack.c.bf16 %v845, %v841
        %850 = vst [vmem:[#allocation2 + $0x1c0] sm:$0xff] %v846
        %851 = vst [vmem:[#allocation2 + $0x1c8] sm:$0xff] %v847
        %852 = vst [vmem:[#allocation2 + $0x1d0] sm:$0xff] %v848
        %853 = vst [vmem:[#allocation2 + $0x1d8] sm:$0xff] %v849
        %v854 = vld [vmem:[%s308] sm:$0xff]
        %v855 = vld [vmem:[%s308 + $0x8] sm:$0xff]
        %v856 = vld [vmem:[%s308 + $0x10] sm:$0xff]
        %v857 = vld [vmem:[%s308 + $0x18] sm:$0xff]
        %v858 = vld [vmem:[%s308 + $0x20] sm:$0xff]
        %v859 = vld [vmem:[%s308 + $0x28] sm:$0xff]
        %v860 = vld [vmem:[%s308 + $0x30] sm:$0xff]
        %v861 = vld [vmem:[%s308 + $0x38] sm:$0xff]
        %v862 = vand.u32 %v854, 7168
        %v863 = vand.u32 %v855, 7168
        %v864 = vand.u32 %v856, 7168
        %v865 = vand.u32 %v857, 7168
        %v866 = vand.u32 %v858, 7168
        %v867 = vand.u32 %v859, 7168
        %v868 = vand.u32 %v860, 7168
        %v869 = vand.u32 %v861, 7168
        %v870 = vcvt.s32.f32 %v862
        %v871 = vcvt.s32.f32 %v863
        %v872 = vcvt.s32.f32 %v864
        %v873 = vcvt.s32.f32 %v865
        %v874 = vcvt.s32.f32 %v866
        %v875 = vcvt.s32.f32 %v867
        %v876 = vcvt.s32.f32 %v868
        %v877 = vcvt.s32.f32 %v869
        %v878 = vpack.c.bf16 %v874, %v870
        %v879 = vpack.c.bf16 %v875, %v871
        %v880 = vpack.c.bf16 %v876, %v872
        %v881 = vpack.c.bf16 %v877, %v873
        %882 = vst [vmem:[#allocation2 + $0x1e0] sm:$0xff] %v878
        %883 = vst [vmem:[#allocation2 + $0x1e8] sm:$0xff] %v879
        %884 = vst [vmem:[#allocation2 + $0x1f0] sm:$0xff] %v880
        %885 = vst [vmem:[#allocation2 + $0x1f8] sm:$0xff] %v881
        %v886 = vld [vmem:[%s308] sm:$0xff]
        %v887 = vld [vmem:[%s308 + $0x8] sm:$0xff]
        %v888 = vld [vmem:[%s308 + $0x10] sm:$0xff]
        %v889 = vld [vmem:[%s308 + $0x18] sm:$0xff]
        %v890 = vld [vmem:[%s308 + $0x20] sm:$0xff]
        %v891 = vld [vmem:[%s308 + $0x28] sm:$0xff]
        %v892 = vld [vmem:[%s308 + $0x30] sm:$0xff]
        %v893 = vld [vmem:[%s308 + $0x38] sm:$0xff]
        %v894 = vand.u32 %v886, 57344
        %v895 = vand.u32 %v887, 57344
        %v896 = vand.u32 %v888, 57344
        %v897 = vand.u32 %v889, 57344
        %v898 = vand.u32 %v890, 57344
        %v899 = vand.u32 %v891, 57344
        %v900 = vand.u32 %v892, 57344
        %v901 = vand.u32 %v893, 57344
        %v902 = vcvt.s32.f32 %v894
        %v903 = vcvt.s32.f32 %v895
        %v904 = vcvt.s32.f32 %v896
        %v905 = vcvt.s32.f32 %v897
        %v906 = vcvt.s32.f32 %v898
        %v907 = vcvt.s32.f32 %v899
        %v908 = vcvt.s32.f32 %v900
        %v909 = vcvt.s32.f32 %v901
        %v910 = vpack.c.bf16 %v906, %v902
        %v911 = vpack.c.bf16 %v907, %v903
        %v912 = vpack.c.bf16 %v908, %v904
        %v913 = vpack.c.bf16 %v909, %v905
        %914 = vst [vmem:[#allocation2 + $0x200] sm:$0xff] %v910
        %915 = vst [vmem:[#allocation2 + $0x208] sm:$0xff] %v911
        %916 = vst [vmem:[#allocation2 + $0x210] sm:$0xff] %v912
        %917 = vst [vmem:[#allocation2 + $0x218] sm:$0xff] %v913
        %v918 = vld [vmem:[%s308] sm:$0xff]
        %v919 = vld [vmem:[%s308 + $0x8] sm:$0xff]
        %v920 = vld [vmem:[%s308 + $0x10] sm:$0xff]
        %v921 = vld [vmem:[%s308 + $0x18] sm:$0xff]
        %v922 = vld [vmem:[%s308 + $0x20] sm:$0xff]
        %v923 = vld [vmem:[%s308 + $0x28] sm:$0xff]
        %v924 = vld [vmem:[%s308 + $0x30] sm:$0xff]
        %v925 = vld [vmem:[%s308 + $0x38] sm:$0xff]
        %v926 = vand.u32 %v918, 458752
        %v927 = vand.u32 %v919, 458752
        %v928 = vand.u32 %v920, 458752
        %v929 = vand.u32 %v921, 458752
        %v930 = vand.u32 %v922, 458752
        %v931 = vand.u32 %v923, 458752
        %v932 = vand.u32 %v924, 458752
        %v933 = vand.u32 %v925, 458752
        %v934 = vcvt.s32.f32 %v926
        %v935 = vcvt.s32.f32 %v927
        %v936 = vcvt.s32.f32 %v928
        %v937 = vcvt.s32.f32 %v929
        %v938 = vcvt.s32.f32 %v930
        %v939 = vcvt.s32.f32 %v931
        %v940 = vcvt.s32.f32 %v932
        %v941 = vcvt.s32.f32 %v933
        %v942 = vpack.c.bf16 %v938, %v934
        %v943 = vpack.c.bf16 %v939, %v935
        %v944 = vpack.c.bf16 %v940, %v936
        %v945 = vpack.c.bf16 %v941, %v937
        %946 = vst [vmem:[#allocation2 + $0x220] sm:$0xff] %v942
        %947 = vst [vmem:[#allocation2 + $0x228] sm:$0xff] %v943
        %948 = vst [vmem:[#allocation2 + $0x230] sm:$0xff] %v944
        %949 = vst [vmem:[#allocation2 + $0x238] sm:$0xff] %v945
        %v950 = vld [vmem:[%s308] sm:$0xff]
        %v951 = vld [vmem:[%s308 + $0x8] sm:$0xff]
        %v952 = vld [vmem:[%s308 + $0x10] sm:$0xff]
        %v953 = vld [vmem:[%s308 + $0x18] sm:$0xff]
        %v954 = vld [vmem:[%s308 + $0x20] sm:$0xff]
        %v955 = vld [vmem:[%s308 + $0x28] sm:$0xff]
        %v956 = vld [vmem:[%s308 + $0x30] sm:$0xff]
        %v957 = vld [vmem:[%s308 + $0x38] sm:$0xff]
        %v958 = vand.u32 %v950, 3670016
        %v959 = vand.u32 %v951, 3670016
        %v960 = vand.u32 %v952, 3670016
        %v961 = vand.u32 %v953, 3670016
        %v962 = vand.u32 %v954, 3670016
        %v963 = vand.u32 %v955, 3670016
        %v964 = vand.u32 %v956, 3670016
        %v965 = vand.u32 %v957, 3670016
        %v966 = vcvt.s32.f32 %v958
        %v967 = vcvt.s32.f32 %v959
        %v968 = vcvt.s32.f32 %v960
        %v969 = vcvt.s32.f32 %v961
        %v970 = vcvt.s32.f32 %v962
        %v971 = vcvt.s32.f32 %v963
        %v972 = vcvt.s32.f32 %v964
        %v973 = vcvt.s32.f32 %v965
        %v974 = vpack.c.bf16 %v970, %v966
        %v975 = vpack.c.bf16 %v971, %v967
        %v976 = vpack.c.bf16 %v972, %v968
        %v977 = vpack.c.bf16 %v973, %v969
        %978 = vst [vmem:[#allocation2 + $0x240] sm:$0xff] %v974
        %979 = vst [vmem:[#allocation2 + $0x248] sm:$0xff] %v975
        %980 = vst [vmem:[#allocation2 + $0x250] sm:$0xff] %v976
        %981 = vst [vmem:[#allocation2 + $0x258] sm:$0xff] %v977
        %v982 = vld [vmem:[%s308] sm:$0xff]
        %v983 = vld [vmem:[%s308 + $0x8] sm:$0xff]
        %v984 = vld [vmem:[%s308 + $0x10] sm:$0xff]
        %v985 = vld [vmem:[%s308 + $0x18] sm:$0xff]
        %v986 = vld [vmem:[%s308 + $0x20] sm:$0xff]
        %v987 = vld [vmem:[%s308 + $0x28] sm:$0xff]
        %v988 = vld [vmem:[%s308 + $0x30] sm:$0xff]
        %v989 = vld [vmem:[%s308 + $0x38] sm:$0xff]
        %v990 = vand.u32 %v982, 29360128
        %v991 = vand.u32 %v983, 29360128
        %v992 = vand.u32 %v984, 29360128
        %v993 = vand.u32 %v985, 29360128
        %v994 = vand.u32 %v986, 29360128
        %v995 = vand.u32 %v987, 29360128
        %v996 = vand.u32 %v988, 29360128
        %v997 = vand.u32 %v989, 29360128
        %v998 = vcvt.s32.f32 %v990
        %v999 = vcvt.s32.f32 %v991
        %v1000 = vcvt.s32.f32 %v992
        %v1001 = vcvt.s32.f32 %v993
        %v1002 = vcvt.s32.f32 %v994
        %v1003 = vcvt.s32.f32 %v995
        %v1004 = vcvt.s32.f32 %v996
        %v1005 = vcvt.s32.f32 %v997
        %v1006 = vpack.c.bf16 %v1002, %v998
        %v1007 = vpack.c.bf16 %v1003, %v999
        %v1008 = vpack.c.bf16 %v1004, %v1000
        %v1009 = vpack.c.bf16 %v1005, %v1001
        %1010 = vst [vmem:[#allocation2 + $0x260] sm:$0xff] %v1006
        %1011 = vst [vmem:[#allocation2 + $0x268] sm:$0xff] %v1007
        %1012 = vst [vmem:[#allocation2 + $0x270] sm:$0xff] %v1008
        %1013 = vst [vmem:[#allocation2 + $0x278] sm:$0xff] %v1009
        %v1014 = vld [vmem:[%s308] sm:$0xff]
        %v1015 = vld [vmem:[%s308 + $0x8] sm:$0xff]
        %v1016 = vld [vmem:[%s308 + $0x10] sm:$0xff]
        %v1017 = vld [vmem:[%s308 + $0x18] sm:$0xff]
        %v1018 = vld [vmem:[%s308 + $0x20] sm:$0xff]
        %v1019 = vld [vmem:[%s308 + $0x28] sm:$0xff]
        %v1020 = vld [vmem:[%s308 + $0x30] sm:$0xff]
        %v1021 = vld [vmem:[%s308 + $0x38] sm:$0xff]
        %v1022 = vand.u32 %v1014, 234881024
        %v1023 = vand.u32 %v1015, 234881024
        %v1024 = vand.u32 %v1016, 234881024
        %v1025 = vand.u32 %v1017, 234881024
        %v1026 = vand.u32 %v1018, 234881024
        %v1027 = vand.u32 %v1019, 234881024
        %v1028 = vand.u32 %v1020, 234881024
        %v1029 = vand.u32 %v1021, 234881024
        %v1030 = vcvt.s32.f32 %v1022
        %v1031 = vcvt.s32.f32 %v1023
        %v1032 = vcvt.s32.f32 %v1024
        %v1033 = vcvt.s32.f32 %v1025
        %v1034 = vcvt.s32.f32 %v1026
        %v1035 = vcvt.s32.f32 %v1027
        %v1036 = vcvt.s32.f32 %v1028
        %v1037 = vcvt.s32.f32 %v1029
        %v1038 = vpack.c.bf16 %v1034, %v1030
        %v1039 = vpack.c.bf16 %v1035, %v1031
        %v1040 = vpack.c.bf16 %v1036, %v1032
        %v1041 = vpack.c.bf16 %v1037, %v1033
        %1042 = vst [vmem:[#allocation2 + $0x280] sm:$0xff] %v1038
        %1043 = vst [vmem:[#allocation2 + $0x288] sm:$0xff] %v1039
        %1044 = vst [vmem:[#allocation2 + $0x290] sm:$0xff] %v1040
        %1045 = vst [vmem:[#allocation2 + $0x298] sm:$0xff] %v1041
        %v1046 = vld [vmem:[%s308] sm:$0xff]
        %v1047 = vld [vmem:[%s308 + $0x8] sm:$0xff]
        %v1048 = vld [vmem:[%s308 + $0x10] sm:$0xff]
        %v1049 = vld [vmem:[%s308 + $0x18] sm:$0xff]
        %v1050 = vld [vmem:[%s308 + $0x20] sm:$0xff]
        %v1051 = vld [vmem:[%s308 + $0x28] sm:$0xff]
        %v1052 = vld [vmem:[%s308 + $0x30] sm:$0xff]
        %v1053 = vld [vmem:[%s308 + $0x38] sm:$0xff]
        %v1054 = vand.u32 %v1046, 1879048192
        %v1055 = vand.u32 %v1047, 1879048192
        %v1056 = vand.u32 %v1048, 1879048192
        %v1057 = vand.u32 %v1049, 1879048192
        %v1058 = vand.u32 %v1050, 1879048192
        %v1059 = vand.u32 %v1051, 1879048192
        %v1060 = vand.u32 %v1052, 1879048192
        %v1061 = vand.u32 %v1053, 1879048192
        %v1062 = vcvt.s32.f32 %v1054
        %v1063 = vcvt.s32.f32 %v1055
        %v1064 = vcvt.s32.f32 %v1056
        %v1065 = vcvt.s32.f32 %v1057
        %v1066 = vcvt.s32.f32 %v1058
        %v1067 = vcvt.s32.f32 %v1059
        %v1068 = vcvt.s32.f32 %v1060
        %v1069 = vcvt.s32.f32 %v1061
        %v1070 = vpack.c.bf16 %v1066, %v1062
        %v1071 = vpack.c.bf16 %v1067, %v1063
        %v1072 = vpack.c.bf16 %v1068, %v1064
        %v1073 = vpack.c.bf16 %v1069, %v1065
        %1074 = vst [vmem:[#allocation2 + $0x2a0] sm:$0xff] %v1070
        %1075 = vst [vmem:[#allocation2 + $0x2a8] sm:$0xff] %v1071
        %1076 = vst [vmem:[#allocation2 + $0x2b0] sm:$0xff] %v1072
        %1077 = vst [vmem:[#allocation2 + $0x2b8] sm:$0xff] %v1073
        %v1078 = vld [vmem:[%s308] sm:$0xff]
        %v1079 = vld [vmem:[%s308 + $0x8] sm:$0xff]
        %v1080 = vld [vmem:[%s308 + $0x10] sm:$0xff]
        %v1081 = vld [vmem:[%s308 + $0x18] sm:$0xff]
        %v1082 = vld [vmem:[%s308 + $0x20] sm:$0xff]
        %v1083 = vld [vmem:[%s308 + $0x28] sm:$0xff]
        %v1084 = vld [vmem:[%s308 + $0x30] sm:$0xff]
        %v1085 = vld [vmem:[%s308 + $0x38] sm:$0xff]
        %v1086 = vshrl.u32 %v1078, 31
        %v1087 = vshrl.u32 %v1079, 31
        %v1088 = vshrl.u32 %v1080, 31
        %v1089 = vshrl.u32 %v1081, 31
        %v1090 = vshrl.u32 %v1082, 31
        %v1091 = vshrl.u32 %v1083, 31
        %v1092 = vshrl.u32 %v1084, 31
        %v1093 = vshrl.u32 %v1085, 31
        %v1094 = vcvt.s32.f32 %v1086
        %v1095 = vcvt.s32.f32 %v1087
        %v1096 = vcvt.s32.f32 %v1088
        %v1097 = vcvt.s32.f32 %v1089
        %v1098 = vcvt.s32.f32 %v1090
        %v1099 = vcvt.s32.f32 %v1091
        %v1100 = vcvt.s32.f32 %v1092
        %v1101 = vcvt.s32.f32 %v1093
        %v1102 = vpack.c.bf16 %v1098, %v1094
        %v1103 = vpack.c.bf16 %v1099, %v1095
        %v1104 = vpack.c.bf16 %v1100, %v1096
        %v1105 = vpack.c.bf16 %v1101, %v1097
        %1106 = vst [vmem:[#allocation2 + $0x2c0] sm:$0xff] %v1102
        %1107 = vst [vmem:[#allocation2 + $0x2c8] sm:$0xff] %v1103
        %1108 = vst [vmem:[#allocation2 + $0x2d0] sm:$0xff] %v1104
        %1109 = vst [vmem:[#allocation2 + $0x2d8] sm:$0xff] %v1105
        %v1110 = vld [vmem:[%s317] sm:$0xff]
        %v1111 = vld [vmem:[%s317 + $0x8] sm:$0xff]
        %v1112 = vld [vmem:[%s317 + $0x10] sm:$0xff]
        %v1113 = vld [vmem:[%s317 + $0x18] sm:$0xff]
        %v1114 = vld [vmem:[%s317 + $0x20] sm:$0xff]
        %v1115 = vld [vmem:[%s317 + $0x28] sm:$0xff]
        %v1116 = vld [vmem:[%s317 + $0x30] sm:$0xff]
        %v1117 = vld [vmem:[%s317 + $0x38] sm:$0xff]
        %v1118 = vand.u32 %v1110, 3
        %v1119 = vand.u32 %v1111, 3
        %v1120 = vand.u32 %v1112, 3
        %v1121 = vand.u32 %v1113, 3
        %v1122 = vand.u32 %v1114, 3
        %v1123 = vand.u32 %v1115, 3
        %v1124 = vand.u32 %v1116, 3
        %v1125 = vand.u32 %v1117, 3
        %v1126 = vcvt.s32.f32 %v1118
        %v1127 = vcvt.s32.f32 %v1119
        %v1128 = vcvt.s32.f32 %v1120
        %v1129 = vcvt.s32.f32 %v1121
        %v1130 = vcvt.s32.f32 %v1122
        %v1131 = vcvt.s32.f32 %v1123
        %v1132 = vcvt.s32.f32 %v1124
        %v1133 = vcvt.s32.f32 %v1125
        %v1134 = vpack.c.bf16 %v1130, %v1126
        %v1135 = vpack.c.bf16 %v1131, %v1127
        %v1136 = vpack.c.bf16 %v1132, %v1128
        %v1137 = vpack.c.bf16 %v1133, %v1129
        %1138 = vst [vmem:[#allocation2 + $0x2e0] sm:$0xff] %v1134
        %1139 = vst [vmem:[#allocation2 + $0x2e8] sm:$0xff] %v1135
        %1140 = vst [vmem:[#allocation2 + $0x2f0] sm:$0xff] %v1136
        %1141 = vst [vmem:[#allocation2 + $0x2f8] sm:$0xff] %v1137
        %v1142 = vld [vmem:[%s317] sm:$0xff]
        %v1143 = vld [vmem:[%s317 + $0x8] sm:$0xff]
        %v1144 = vld [vmem:[%s317 + $0x10] sm:$0xff]
        %v1145 = vld [vmem:[%s317 + $0x18] sm:$0xff]
        %v1146 = vld [vmem:[%s317 + $0x20] sm:$0xff]
        %v1147 = vld [vmem:[%s317 + $0x28] sm:$0xff]
        %v1148 = vld [vmem:[%s317 + $0x30] sm:$0xff]
        %v1149 = vld [vmem:[%s317 + $0x38] sm:$0xff]
        %v1150 = vand.u32 %v1142, 28
        %v1151 = vand.u32 %v1143, 28
        %v1152 = vand.u32 %v1144, 28
        %v1153 = vand.u32 %v1145, 28
        %v1154 = vand.u32 %v1146, 28
        %v1155 = vand.u32 %v1147, 28
        %v1156 = vand.u32 %v1148, 28
        %v1157 = vand.u32 %v1149, 28
        %v1158 = vcvt.s32.f32 %v1150
        %v1159 = vcvt.s32.f32 %v1151
        %v1160 = vcvt.s32.f32 %v1152
        %v1161 = vcvt.s32.f32 %v1153
        %v1162 = vcvt.s32.f32 %v1154
        %v1163 = vcvt.s32.f32 %v1155
        %v1164 = vcvt.s32.f32 %v1156
        %v1165 = vcvt.s32.f32 %v1157
        %v1166 = vpack.c.bf16 %v1162, %v1158
        %v1167 = vpack.c.bf16 %v1163, %v1159
        %v1168 = vpack.c.bf16 %v1164, %v1160
        %v1169 = vpack.c.bf16 %v1165, %v1161
        %1170 = vst [vmem:[#allocation2 + $0x300] sm:$0xff] %v1166
        %1171 = vst [vmem:[#allocation2 + $0x308] sm:$0xff] %v1167
        %1172 = vst [vmem:[#allocation2 + $0x310] sm:$0xff] %v1168
        %1173 = vst [vmem:[#allocation2 + $0x318] sm:$0xff] %v1169
        %v1174 = vld [vmem:[%s317] sm:$0xff]
        %v1175 = vld [vmem:[%s317 + $0x8] sm:$0xff]
        %v1176 = vld [vmem:[%s317 + $0x10] sm:$0xff]
        %v1177 = vld [vmem:[%s317 + $0x18] sm:$0xff]
        %v1178 = vld [vmem:[%s317 + $0x20] sm:$0xff]
        %v1179 = vld [vmem:[%s317 + $0x28] sm:$0xff]
        %v1180 = vld [vmem:[%s317 + $0x30] sm:$0xff]
        %v1181 = vld [vmem:[%s317 + $0x38] sm:$0xff]
        %v1182 = vand.u32 %v1174, 224
        %v1183 = vand.u32 %v1175, 224
        %v1184 = vand.u32 %v1176, 224
        %v1185 = vand.u32 %v1177, 224
        %v1186 = vand.u32 %v1178, 224
        %v1187 = vand.u32 %v1179, 224
        %v1188 = vand.u32 %v1180, 224
        %v1189 = vand.u32 %v1181, 224
        %v1190 = vcvt.s32.f32 %v1182
        %v1191 = vcvt.s32.f32 %v1183
        %v1192 = vcvt.s32.f32 %v1184
        %v1193 = vcvt.s32.f32 %v1185
        %v1194 = vcvt.s32.f32 %v1186
        %v1195 = vcvt.s32.f32 %v1187
        %v1196 = vcvt.s32.f32 %v1188
        %v1197 = vcvt.s32.f32 %v1189
        %v1198 = vpack.c.bf16 %v1194, %v1190
        %v1199 = vpack.c.bf16 %v1195, %v1191
        %v1200 = vpack.c.bf16 %v1196, %v1192
        %v1201 = vpack.c.bf16 %v1197, %v1193
        %1202 = vst [vmem:[#allocation2 + $0x320] sm:$0xff] %v1198
        %1203 = vst [vmem:[#allocation2 + $0x328] sm:$0xff] %v1199
        %1204 = vst [vmem:[#allocation2 + $0x330] sm:$0xff] %v1200
        %1205 = vst [vmem:[#allocation2 + $0x338] sm:$0xff] %v1201
        %v1206 = vld [vmem:[%s317] sm:$0xff]
        %v1207 = vld [vmem:[%s317 + $0x8] sm:$0xff]
        %v1208 = vld [vmem:[%s317 + $0x10] sm:$0xff]
        %v1209 = vld [vmem:[%s317 + $0x18] sm:$0xff]
        %v1210 = vld [vmem:[%s317 + $0x20] sm:$0xff]
        %v1211 = vld [vmem:[%s317 + $0x28] sm:$0xff]
        %v1212 = vld [vmem:[%s317 + $0x30] sm:$0xff]
        %v1213 = vld [vmem:[%s317 + $0x38] sm:$0xff]
        %v1214 = vand.u32 %v1206, 1792
        %v1215 = vand.u32 %v1207, 1792
        %v1216 = vand.u32 %v1208, 1792
        %v1217 = vand.u32 %v1209, 1792
        %v1218 = vand.u32 %v1210, 1792
        %v1219 = vand.u32 %v1211, 1792
        %v1220 = vand.u32 %v1212, 1792
        %v1221 = vand.u32 %v1213, 1792
        %v1222 = vcvt.s32.f32 %v1214
        %v1223 = vcvt.s32.f32 %v1215
        %v1224 = vcvt.s32.f32 %v1216
        %v1225 = vcvt.s32.f32 %v1217
        %v1226 = vcvt.s32.f32 %v1218
        %v1227 = vcvt.s32.f32 %v1219
        %v1228 = vcvt.s32.f32 %v1220
        %v1229 = vcvt.s32.f32 %v1221
        %v1230 = vpack.c.bf16 %v1226, %v1222
        %v1231 = vpack.c.bf16 %v1227, %v1223
        %v1232 = vpack.c.bf16 %v1228, %v1224
        %v1233 = vpack.c.bf16 %v1229, %v1225
        %1234 = vst [vmem:[#allocation2 + $0x340] sm:$0xff] %v1230
        %1235 = vst [vmem:[#allocation2 + $0x348] sm:$0xff] %v1231
        %1236 = vst [vmem:[#allocation2 + $0x350] sm:$0xff] %v1232
        %1237 = vst [vmem:[#allocation2 + $0x358] sm:$0xff] %v1233
        %v1238 = vld [vmem:[%s317] sm:$0xff]
        %v1239 = vld [vmem:[%s317 + $0x8] sm:$0xff]
        %v1240 = vld [vmem:[%s317 + $0x10] sm:$0xff]
        %v1241 = vld [vmem:[%s317 + $0x18] sm:$0xff]
        %v1242 = vld [vmem:[%s317 + $0x20] sm:$0xff]
        %v1243 = vld [vmem:[%s317 + $0x28] sm:$0xff]
        %v1244 = vld [vmem:[%s317 + $0x30] sm:$0xff]
        %v1245 = vld [vmem:[%s317 + $0x38] sm:$0xff]
        %v1246 = vand.u32 %v1238, 14336
        %v1247 = vand.u32 %v1239, 14336
        %v1248 = vand.u32 %v1240, 14336
        %v1249 = vand.u32 %v1241, 14336
        %v1250 = vand.u32 %v1242, 14336
        %v1251 = vand.u32 %v1243, 14336
        %v1252 = vand.u32 %v1244, 14336
        %v1253 = vand.u32 %v1245, 14336
        %v1254 = vcvt.s32.f32 %v1246
        %v1255 = vcvt.s32.f32 %v1247
        %v1256 = vcvt.s32.f32 %v1248
        %v1257 = vcvt.s32.f32 %v1249
        %v1258 = vcvt.s32.f32 %v1250
        %v1259 = vcvt.s32.f32 %v1251
        %v1260 = vcvt.s32.f32 %v1252
        %v1261 = vcvt.s32.f32 %v1253
        %v1262 = vpack.c.bf16 %v1258, %v1254
        %v1263 = vpack.c.bf16 %v1259, %v1255
        %v1264 = vpack.c.bf16 %v1260, %v1256
        %v1265 = vpack.c.bf16 %v1261, %v1257
        %1266 = vst [vmem:[#allocation2 + $0x360] sm:$0xff] %v1262
        %1267 = vst [vmem:[#allocation2 + $0x368] sm:$0xff] %v1263
        %1268 = vst [vmem:[#allocation2 + $0x370] sm:$0xff] %v1264
        %1269 = vst [vmem:[#allocation2 + $0x378] sm:$0xff] %v1265
        %v1270 = vld [vmem:[%s317] sm:$0xff]
        %v1271 = vld [vmem:[%s317 + $0x8] sm:$0xff]
        %v1272 = vld [vmem:[%s317 + $0x10] sm:$0xff]
        %v1273 = vld [vmem:[%s317 + $0x18] sm:$0xff]
        %v1274 = vld [vmem:[%s317 + $0x20] sm:$0xff]
        %v1275 = vld [vmem:[%s317 + $0x28] sm:$0xff]
        %v1276 = vld [vmem:[%s317 + $0x30] sm:$0xff]
        %v1277 = vld [vmem:[%s317 + $0x38] sm:$0xff]
        %v1278 = vand.u32 %v1270, 114688
        %v1279 = vand.u32 %v1271, 114688
        %v1280 = vand.u32 %v1272, 114688
        %v1281 = vand.u32 %v1273, 114688
        %v1282 = vand.u32 %v1274, 114688
        %v1283 = vand.u32 %v1275, 114688
        %v1284 = vand.u32 %v1276, 114688
        %v1285 = vand.u32 %v1277, 114688
        %v1286 = vcvt.s32.f32 %v1278
        %v1287 = vcvt.s32.f32 %v1279
        %v1288 = vcvt.s32.f32 %v1280
        %v1289 = vcvt.s32.f32 %v1281
        %v1290 = vcvt.s32.f32 %v1282
        %v1291 = vcvt.s32.f32 %v1283
        %v1292 = vcvt.s32.f32 %v1284
        %v1293 = vcvt.s32.f32 %v1285
        %v1294 = vpack.c.bf16 %v1290, %v1286
        %v1295 = vpack.c.bf16 %v1291, %v1287
        %v1296 = vpack.c.bf16 %v1292, %v1288
        %v1297 = vpack.c.bf16 %v1293, %v1289
        %1298 = vst [vmem:[#allocation2 + $0x380] sm:$0xff] %v1294
        %1299 = vst [vmem:[#allocation2 + $0x388] sm:$0xff] %v1295
        %1300 = vst [vmem:[#allocation2 + $0x390] sm:$0xff] %v1296
        %1301 = vst [vmem:[#allocation2 + $0x398] sm:$0xff] %v1297
        %v1302 = vld [vmem:[%s317] sm:$0xff]
        %v1303 = vld [vmem:[%s317 + $0x8] sm:$0xff]
        %v1304 = vld [vmem:[%s317 + $0x10] sm:$0xff]
        %v1305 = vld [vmem:[%s317 + $0x18] sm:$0xff]
        %v1306 = vld [vmem:[%s317 + $0x20] sm:$0xff]
        %v1307 = vld [vmem:[%s317 + $0x28] sm:$0xff]
        %v1308 = vld [vmem:[%s317 + $0x30] sm:$0xff]
        %v1309 = vld [vmem:[%s317 + $0x38] sm:$0xff]
        %v1310 = vand.u32 %v1302, 917504
        %v1311 = vand.u32 %v1303, 917504
        %v1312 = vand.u32 %v1304, 917504
        %v1313 = vand.u32 %v1305, 917504
        %v1314 = vand.u32 %v1306, 917504
        %v1315 = vand.u32 %v1307, 917504
        %v1316 = vand.u32 %v1308, 917504
        %v1317 = vand.u32 %v1309, 917504
        %v1318 = vcvt.s32.f32 %v1310
        %v1319 = vcvt.s32.f32 %v1311
        %v1320 = vcvt.s32.f32 %v1312
        %v1321 = vcvt.s32.f32 %v1313
        %v1322 = vcvt.s32.f32 %v1314
        %v1323 = vcvt.s32.f32 %v1315
        %v1324 = vcvt.s32.f32 %v1316
        %v1325 = vcvt.s32.f32 %v1317
        %v1326 = vpack.c.bf16 %v1322, %v1318
        %v1327 = vpack.c.bf16 %v1323, %v1319
        %v1328 = vpack.c.bf16 %v1324, %v1320
        %v1329 = vpack.c.bf16 %v1325, %v1321
        %1330 = vst [vmem:[#allocation2 + $0x3a0] sm:$0xff] %v1326
        %1331 = vst [vmem:[#allocation2 + $0x3a8] sm:$0xff] %v1327
        %1332 = vst [vmem:[#allocation2 + $0x3b0] sm:$0xff] %v1328
        %1333 = vst [vmem:[#allocation2 + $0x3b8] sm:$0xff] %v1329
        %v1334 = vld [vmem:[%s317] sm:$0xff]
        %v1335 = vld [vmem:[%s317 + $0x8] sm:$0xff]
        %v1336 = vld [vmem:[%s317 + $0x10] sm:$0xff]
        %v1337 = vld [vmem:[%s317 + $0x18] sm:$0xff]
        %v1338 = vld [vmem:[%s317 + $0x20] sm:$0xff]
        %v1339 = vld [vmem:[%s317 + $0x28] sm:$0xff]
        %v1340 = vld [vmem:[%s317 + $0x30] sm:$0xff]
        %v1341 = vld [vmem:[%s317 + $0x38] sm:$0xff]
        %v1342 = vand.u32 %v1334, 7340032
        %v1343 = vand.u32 %v1335, 7340032
        %v1344 = vand.u32 %v1336, 7340032
        %v1345 = vand.u32 %v1337, 7340032
        %v1346 = vand.u32 %v1338, 7340032
        %v1347 = vand.u32 %v1339, 7340032
        %v1348 = vand.u32 %v1340, 7340032
        %v1349 = vand.u32 %v1341, 7340032
        %v1350 = vcvt.s32.f32 %v1342
        %v1351 = vcvt.s32.f32 %v1343
        %v1352 = vcvt.s32.f32 %v1344
        %v1353 = vcvt.s32.f32 %v1345
        %v1354 = vcvt.s32.f32 %v1346
        %v1355 = vcvt.s32.f32 %v1347
        %v1356 = vcvt.s32.f32 %v1348
        %v1357 = vcvt.s32.f32 %v1349
        %v1358 = vpack.c.bf16 %v1354, %v1350
        %v1359 = vpack.c.bf16 %v1355, %v1351
        %v1360 = vpack.c.bf16 %v1356, %v1352
        %v1361 = vpack.c.bf16 %v1357, %v1353
        %1362 = vst [vmem:[#allocation2 + $0x3c0] sm:$0xff] %v1358
        %1363 = vst [vmem:[#allocation2 + $0x3c8] sm:$0xff] %v1359
        %1364 = vst [vmem:[#allocation2 + $0x3d0] sm:$0xff] %v1360
        %1365 = vst [vmem:[#allocation2 + $0x3d8] sm:$0xff] %v1361
        %v1366 = vld [vmem:[%s317] sm:$0xff]
        %v1367 = vld [vmem:[%s317 + $0x8] sm:$0xff]
        %v1368 = vld [vmem:[%s317 + $0x10] sm:$0xff]
        %v1369 = vld [vmem:[%s317 + $0x18] sm:$0xff]
        %v1370 = vld [vmem:[%s317 + $0x20] sm:$0xff]
        %v1371 = vld [vmem:[%s317 + $0x28] sm:$0xff]
        %v1372 = vld [vmem:[%s317 + $0x30] sm:$0xff]
        %v1373 = vld [vmem:[%s317 + $0x38] sm:$0xff]
        %v1374 = vand.u32 %v1366, 58720256
        %v1375 = vand.u32 %v1367, 58720256
        %v1376 = vand.u32 %v1368, 58720256
        %v1377 = vand.u32 %v1369, 58720256
        %v1378 = vand.u32 %v1370, 58720256
        %v1379 = vand.u32 %v1371, 58720256
        %v1380 = vand.u32 %v1372, 58720256
        %v1381 = vand.u32 %v1373, 58720256
        %v1382 = vcvt.s32.f32 %v1374
        %v1383 = vcvt.s32.f32 %v1375
        %v1384 = vcvt.s32.f32 %v1376
        %v1385 = vcvt.s32.f32 %v1377
        %v1386 = vcvt.s32.f32 %v1378
        %v1387 = vcvt.s32.f32 %v1379
        %v1388 = vcvt.s32.f32 %v1380
        %v1389 = vcvt.s32.f32 %v1381
        %v1390 = vpack.c.bf16 %v1386, %v1382
        %v1391 = vpack.c.bf16 %v1387, %v1383
        %v1392 = vpack.c.bf16 %v1388, %v1384
        %v1393 = vpack.c.bf16 %v1389, %v1385
        %1394 = vst [vmem:[#allocation2 + $0x3e0] sm:$0xff] %v1390
        %1395 = vst [vmem:[#allocation2 + $0x3e8] sm:$0xff] %v1391
        %1396 = vst [vmem:[#allocation2 + $0x3f0] sm:$0xff] %v1392
        %1397 = vst [vmem:[#allocation2 + $0x3f8] sm:$0xff] %v1393
        %v1398 = vld [vmem:[%s317] sm:$0xff]
        %v1399 = vld [vmem:[%s317 + $0x8] sm:$0xff]
        %v1400 = vld [vmem:[%s317 + $0x10] sm:$0xff]
        %v1401 = vld [vmem:[%s317 + $0x18] sm:$0xff]
        %v1402 = vld [vmem:[%s317 + $0x20] sm:$0xff]
        %v1403 = vld [vmem:[%s317 + $0x28] sm:$0xff]
        %v1404 = vld [vmem:[%s317 + $0x30] sm:$0xff]
        %v1405 = vld [vmem:[%s317 + $0x38] sm:$0xff]
        %v1406 = vand.u32 %v1398, 469762048
        %v1407 = vand.u32 %v1399, 469762048
        %v1408 = vand.u32 %v1400, 469762048
        %v1409 = vand.u32 %v1401, 469762048
        %v1410 = vand.u32 %v1402, 469762048
        %v1411 = vand.u32 %v1403, 469762048
        %v1412 = vand.u32 %v1404, 469762048
        %v1413 = vand.u32 %v1405, 469762048
        %v1414 = vcvt.s32.f32 %v1406
        %v1415 = vcvt.s32.f32 %v1407
        %v1416 = vcvt.s32.f32 %v1408
        %v1417 = vcvt.s32.f32 %v1409
        %v1418 = vcvt.s32.f32 %v1410
        %v1419 = vcvt.s32.f32 %v1411
        %v1420 = vcvt.s32.f32 %v1412
        %v1421 = vcvt.s32.f32 %v1413
        %v1422 = vpack.c.bf16 %v1418, %v1414
        %v1423 = vpack.c.bf16 %v1419, %v1415
        %v1424 = vpack.c.bf16 %v1420, %v1416
        %v1425 = vpack.c.bf16 %v1421, %v1417
        %1426 = vst [vmem:[#allocation2 + $0x400] sm:$0xff] %v1422
        %1427 = vst [vmem:[#allocation2 + $0x408] sm:$0xff] %v1423
        %1428 = vst [vmem:[#allocation2 + $0x410] sm:$0xff] %v1424
        %1429 = vst [vmem:[#allocation2 + $0x418] sm:$0xff] %v1425
        %v1430 = vld [vmem:[%s317] sm:$0xff]
        %v1431 = vld [vmem:[%s317 + $0x8] sm:$0xff]
        %v1432 = vld [vmem:[%s317 + $0x10] sm:$0xff]
        %v1433 = vld [vmem:[%s317 + $0x18] sm:$0xff]
        %v1434 = vld [vmem:[%s317 + $0x20] sm:$0xff]
        %v1435 = vld [vmem:[%s317 + $0x28] sm:$0xff]
        %v1436 = vld [vmem:[%s317 + $0x30] sm:$0xff]
        %v1437 = vld [vmem:[%s317 + $0x38] sm:$0xff]
        %v1438 = vshrl.u32 %v1430, 29
        %v1439 = vshrl.u32 %v1431, 29
        %v1440 = vshrl.u32 %v1432, 29
        %v1441 = vshrl.u32 %v1433, 29
        %v1442 = vshrl.u32 %v1434, 29
        %v1443 = vshrl.u32 %v1435, 29
        %v1444 = vshrl.u32 %v1436, 29
        %v1445 = vshrl.u32 %v1437, 29
        %v1446 = vcvt.s32.f32 %v1438
        %v1447 = vcvt.s32.f32 %v1439
        %v1448 = vcvt.s32.f32 %v1440
        %v1449 = vcvt.s32.f32 %v1441
        %v1450 = vcvt.s32.f32 %v1442
        %v1451 = vcvt.s32.f32 %v1443
        %v1452 = vcvt.s32.f32 %v1444
        %v1453 = vcvt.s32.f32 %v1445
        %v1454 = vpack.c.bf16 %v1450, %v1446
        %v1455 = vpack.c.bf16 %v1451, %v1447
        %v1456 = vpack.c.bf16 %v1452, %v1448
        %v1457 = vpack.c.bf16 %v1453, %v1449
        %1458 = vst [vmem:[#allocation2 + $0x420] sm:$0xff] %v1454
        %1459 = vst [vmem:[#allocation2 + $0x428] sm:$0xff] %v1455
        %1460 = vst [vmem:[#allocation2 + $0x430] sm:$0xff] %v1456
        %1461 = vst [vmem:[#allocation2 + $0x438] sm:$0xff] %v1457
        %v1462 = vld [vmem:[#allocation3] sm:$0x1f]
        %v1463 = vld [vmem:[#allocation2] sm:$0xff]
        %v1464 = vld [vmem:[#allocation2 + $0x8] sm:$0xff]
        %v1465 = vld [vmem:[#allocation2 + $0x10] sm:$0xff]
        %v1466 = vld [vmem:[#allocation2 + $0x18] sm:$0xff]
        %v1467 = vld [vmem:[#allocation2 + $0x20] sm:$0xff]
        %v1468 = vld [vmem:[#allocation2 + $0x28] sm:$0xff]
        %v1469 = vld [vmem:[#allocation2 + $0x30] sm:$0xff]
        %v1470 = vld [vmem:[#allocation2 + $0x38] sm:$0xff]
        %v1471 = vld [vmem:[#allocation2 + $0x40] sm:$0xff]
        %v1472 = vld [vmem:[#allocation2 + $0x48] sm:$0xff]
        %v1473 = vld [vmem:[#allocation2 + $0x50] sm:$0xff]
        %v1474 = vld [vmem:[#allocation2 + $0x58] sm:$0xff]
        %v1475 = vld [vmem:[#allocation2 + $0x60] sm:$0xff]
        %v1476 = vld [vmem:[#allocation2 + $0x68] sm:$0xff]
        %v1477 = vld [vmem:[#allocation2 + $0x70] sm:$0xff]
        %v1478 = vld [vmem:[#allocation2 + $0x78] sm:$0xff]
        %v1479 = vld [vmem:[#allocation2 + $0x80] sm:$0xff]
        %v1480 = vld [vmem:[#allocation2 + $0x88] sm:$0xff]
        %v1481 = vld [vmem:[#allocation2 + $0x90] sm:$0xff]
        %v1482 = vld [vmem:[#allocation2 + $0x98] sm:$0xff]
        %v1483 = vld [vmem:[#allocation2 + $0xa0] sm:$0xff]
        %v1484 = vld [vmem:[#allocation2 + $0xa8] sm:$0xff]
        %v1485 = vld [vmem:[#allocation2 + $0xb0] sm:$0xff]
        %v1486 = vld [vmem:[#allocation2 + $0xb8] sm:$0xff]
        %v1487 = vld [vmem:[#allocation2 + $0xc0] sm:$0xff]
        %v1488 = vld [vmem:[#allocation2 + $0xc8] sm:$0xff]
        %v1489 = vld [vmem:[#allocation2 + $0xd0] sm:$0xff]
        %v1490 = vld [vmem:[#allocation2 + $0xd8] sm:$0xff]
        %v1491 = vld [vmem:[#allocation2 + $0xe0] sm:$0xff]
        %v1492 = vld [vmem:[#allocation2 + $0xe8] sm:$0xff]
        %v1493 = vld [vmem:[#allocation2 + $0xf0] sm:$0xff]
        %v1494 = vld [vmem:[#allocation2 + $0xf8] sm:$0xff]
        %v1495 = vld [vmem:[#allocation2 + $0x100] sm:$0xff]
        %v1496 = vld [vmem:[#allocation2 + $0x108] sm:$0xff]
        %v1497 = vld [vmem:[#allocation2 + $0x110] sm:$0xff]
        %v1498 = vld [vmem:[#allocation2 + $0x118] sm:$0xff]
        %v1499 = vld [vmem:[#allocation2 + $0x120] sm:$0xff]
        %v1500 = vld [vmem:[#allocation2 + $0x128] sm:$0xff]
        %v1501 = vld [vmem:[#allocation2 + $0x130] sm:$0xff]
        %v1502 = vld [vmem:[#allocation2 + $0x138] sm:$0xff]
        %v1503 = vld [vmem:[#allocation2 + $0x140] sm:$0xff]
        %v1504 = vld [vmem:[#allocation2 + $0x148] sm:$0xff]
        %v1505 = vld [vmem:[#allocation2 + $0x150] sm:$0xff]
        %v1506 = vld [vmem:[#allocation2 + $0x158] sm:$0xff]
        %v1507 = vld [vmem:[#allocation2 + $0x160] sm:$0xff]
        %v1508 = vld [vmem:[#allocation2 + $0x168] sm:$0xff]
        %v1509 = vld [vmem:[#allocation2 + $0x170] sm:$0xff]
        %v1510 = vld [vmem:[#allocation2 + $0x178] sm:$0xff]
        %v1511 = vld [vmem:[#allocation2 + $0x180] sm:$0xff]
        %v1512 = vld [vmem:[#allocation2 + $0x188] sm:$0xff]
        %v1513 = vld [vmem:[#allocation2 + $0x190] sm:$0xff]
        %v1514 = vld [vmem:[#allocation2 + $0x198] sm:$0xff]
        %v1515 = vld [vmem:[#allocation2 + $0x1a0] sm:$0xff]
        %v1516 = vld [vmem:[#allocation2 + $0x1a8] sm:$0xff]
        %v1517 = vld [vmem:[#allocation2 + $0x1b0] sm:$0xff]
        %v1518 = vld [vmem:[#allocation2 + $0x1b8] sm:$0xff]
        %v1519 = vld [vmem:[#allocation2 + $0x1c0] sm:$0xff]
        %v1520 = vld [vmem:[#allocation2 + $0x1c8] sm:$0xff]
        %v1521 = vld [vmem:[#allocation2 + $0x1d0] sm:$0xff]
        %v1522 = vld [vmem:[#allocation2 + $0x1d8] sm:$0xff]
        %v1523 = vld [vmem:[#allocation2 + $0x1e0] sm:$0xff]
        %v1524 = vld [vmem:[#allocation2 + $0x1e8] sm:$0xff]
        %v1525 = vld [vmem:[#allocation2 + $0x1f0] sm:$0xff]
        %v1526 = vld [vmem:[#allocation2 + $0x1f8] sm:$0xff]
        %v1527 = vld [vmem:[#allocation2 + $0x200] sm:$0xff]
        %v1528 = vld [vmem:[#allocation2 + $0x208] sm:$0xff]
        %v1529 = vld [vmem:[#allocation2 + $0x210] sm:$0xff]
        %v1530 = vld [vmem:[#allocation2 + $0x218] sm:$0xff]
        %v1531 = vld [vmem:[#allocation2 + $0x220] sm:$0xff]
        %v1532 = vld [vmem:[#allocation2 + $0x228] sm:$0xff]
        %v1533 = vld [vmem:[#allocation2 + $0x230] sm:$0xff]
        %v1534 = vld [vmem:[#allocation2 + $0x238] sm:$0xff]
        %v1535 = vld [vmem:[#allocation2 + $0x240] sm:$0xff]
        %v1536 = vld [vmem:[#allocation2 + $0x248] sm:$0xff]
        %v1537 = vld [vmem:[#allocation2 + $0x250] sm:$0xff]
        %v1538 = vld [vmem:[#allocation2 + $0x258] sm:$0xff]
        %v1539 = vld [vmem:[#allocation2 + $0x260] sm:$0xff]
        %v1540 = vld [vmem:[#allocation2 + $0x268] sm:$0xff]
        %v1541 = vld [vmem:[#allocation2 + $0x270] sm:$0xff]
        %v1542 = vld [vmem:[#allocation2 + $0x278] sm:$0xff]
        %v1543 = vld [vmem:[#allocation2 + $0x280] sm:$0xff]
        %v1544 = vld [vmem:[#allocation2 + $0x288] sm:$0xff]
        %v1545 = vld [vmem:[#allocation2 + $0x290] sm:$0xff]
        %v1546 = vld [vmem:[#allocation2 + $0x298] sm:$0xff]
        %v1547 = vld [vmem:[#allocation2 + $0x2a0] sm:$0xff]
        %v1548 = vld [vmem:[#allocation2 + $0x2a8] sm:$0xff]
        %v1549 = vld [vmem:[#allocation2 + $0x2b0] sm:$0xff]
        %v1550 = vld [vmem:[#allocation2 + $0x2b8] sm:$0xff]
        %v1551 = vld [vmem:[#allocation2 + $0x2c0] sm:$0xff]
        %v1552 = vld [vmem:[#allocation2 + $0x2c8] sm:$0xff]
        %v1553 = vld [vmem:[#allocation2 + $0x2d0] sm:$0xff]
        %v1554 = vld [vmem:[#allocation2 + $0x2d8] sm:$0xff]
        %v1555 = vld [vmem:[#allocation2 + $0x2e0] sm:$0xff]
        %v1556 = vld [vmem:[#allocation2 + $0x2e8] sm:$0xff]
        %v1557 = vld [vmem:[#allocation2 + $0x2f0] sm:$0xff]
        %v1558 = vld [vmem:[#allocation2 + $0x2f8] sm:$0xff]
        %v1559 = vld [vmem:[#allocation2 + $0x300] sm:$0xff]
        %v1560 = vld [vmem:[#allocation2 + $0x308] sm:$0xff]
        %v1561 = vld [vmem:[#allocation2 + $0x310] sm:$0xff]
        %v1562 = vld [vmem:[#allocation2 + $0x318] sm:$0xff]
        %v1563 = vld [vmem:[#allocation2 + $0x320] sm:$0xff]
        %v1564 = vld [vmem:[#allocation2 + $0x328] sm:$0xff]
        %v1565 = vld [vmem:[#allocation2 + $0x330] sm:$0xff]
        %v1566 = vld [vmem:[#allocation2 + $0x338] sm:$0xff]
        %v1567 = vld [vmem:[#allocation2 + $0x340] sm:$0xff]
        %v1568 = vld [vmem:[#allocation2 + $0x348] sm:$0xff]
        %v1569 = vld [vmem:[#allocation2 + $0x350] sm:$0xff]
        %v1570 = vld [vmem:[#allocation2 + $0x358] sm:$0xff]
        %v1571 = vld [vmem:[#allocation2 + $0x360] sm:$0xff]
        %v1572 = vld [vmem:[#allocation2 + $0x368] sm:$0xff]
        %v1573 = vld [vmem:[#allocation2 + $0x370] sm:$0xff]
        %v1574 = vld [vmem:[#allocation2 + $0x378] sm:$0xff]
        %v1575 = vld [vmem:[#allocation2 + $0x380] sm:$0xff]
        %v1576 = vld [vmem:[#allocation2 + $0x388] sm:$0xff]
        %v1577 = vld [vmem:[#allocation2 + $0x390] sm:$0xff]
        %v1578 = vld [vmem:[#allocation2 + $0x398] sm:$0xff]
        %v1579 = vld [vmem:[#allocation2 + $0x3a0] sm:$0xff]
        %v1580 = vld [vmem:[#allocation2 + $0x3a8] sm:$0xff]
        %v1581 = vld [vmem:[#allocation2 + $0x3b0] sm:$0xff]
        %v1582 = vld [vmem:[#allocation2 + $0x3b8] sm:$0xff]
        %v1583 = vld [vmem:[#allocation2 + $0x3c0] sm:$0xff]
        %v1584 = vld [vmem:[#allocation2 + $0x3c8] sm:$0xff]
        %v1585 = vld [vmem:[#allocation2 + $0x3d0] sm:$0xff]
        %v1586 = vld [vmem:[#allocation2 + $0x3d8] sm:$0xff]
        %v1587 = vld [vmem:[#allocation2 + $0x3e0] sm:$0xff]
        %v1588 = vld [vmem:[#allocation2 + $0x3e8] sm:$0xff]
        %v1589 = vld [vmem:[#allocation2 + $0x3f0] sm:$0xff]
        %v1590 = vld [vmem:[#allocation2 + $0x3f8] sm:$0xff]
        %v1591 = vld [vmem:[#allocation2 + $0x400] sm:$0xff]
        %v1592 = vld [vmem:[#allocation2 + $0x408] sm:$0xff]
        %v1593 = vld [vmem:[#allocation2 + $0x410] sm:$0xff]
        %v1594 = vld [vmem:[#allocation2 + $0x418] sm:$0xff]
        %v1595 = vld [vmem:[#allocation2 + $0x420] sm:$0xff]
        %v1596 = vld [vmem:[#allocation2 + $0x428] sm:$0xff]
        %v1597 = vld [vmem:[#allocation2 + $0x430] sm:$0xff]
        %v1598 = vld [vmem:[#allocation2 + $0x438] sm:$0xff]
        %v1600 = vcombine.high %v1462, %v1462
        %v1602 = vunpack.c.l.s4 1966171168
        %v1603 = vunpack.c.0.s8 %v1602
        %v1604 = vlaneseq
        %v1605 = vshrl.u32 %v1604, 7
        %v1606 = vsub.s32 %v1603, %v1605
        %v1607 = vrot.slane %v1462, %v1606
        %v1609 = vunpack.c.l.s4 1966171168
        %v1610 = vunpack.c.0.s8 %v1609
        %v1611 = vlaneseq
        %v1612 = vshrl.u32 %v1611, 7
        %v1613 = vsub.s32 %v1610, %v1612
        %v1614 = vrot.slane %v1600, %v1613
        %v1615 = vcombine.high %v1607, %v1607
        %v1617 = vunpack.c.l.s4 1966171168
        %v1618 = vunpack.c.0.s8 %v1617
        %v1619 = vlaneseq
        %v1620 = vshrl.u32 %v1619, 7
        %v1621 = vsub.s32 %v1618, %v1620
        %v1622 = vrot.slane %v1607, %v1621
        %v1624 = vunpack.c.l.s4 1966171168
        %v1625 = vunpack.c.0.s8 %v1624
        %v1626 = vlaneseq
        %v1627 = vshrl.u32 %v1626, 7
        %v1628 = vsub.s32 %v1625, %v1627
        %v1629 = vrot.slane %v1614, %v1628
        %v1631 = vunpack.c.l.s4 1966171168
        %v1632 = vunpack.c.0.s8 %v1631
        %v1633 = vlaneseq
        %v1634 = vshrl.u32 %v1633, 7
        %v1635 = vsub.s32 %v1632, %v1634
        %v1636 = vrot.slane %v1615, %v1635
        %v1637 = vcombine.high %v1622, %v1622
        %v1638 = vcombine.high %v1636, %v1636
        %vm1643 = vcmask 261120
        %v1645 = vsel %vm1643, %v1629, 0
        %1647 = vmatprep.subr.bf16.mxu0 %v1464
        %1648 = vmatpush1.bf16.msra.mxu0 %v1463
        %1649 = vmatprep.subr.bf16.mxu0 %v1468
        %1650 = vmatpush1.bf16.msra.mxu0 %v1467
        %1651 = vmatprep.subr.bf16.mxu0 %v1472
        %1652 = vmatpush1.bf16.msra.mxu0 %v1471
        %1653 = vmatprep.subr.bf16.mxu0 %v1476
        %1654 = vmatpush1.bf16.msra.mxu0 %v1475
        %1655 = vmatprep.subr.bf16.mxu0 %v1480
        %1656 = vmatpush1.bf16.msra.mxu0 %v1479
        %1657 = vmatprep.subr.bf16.mxu0 %v1484
        %1658 = vmatpush1.bf16.msra.mxu0 %v1483
        %1659 = vmatprep.subr.bf16.mxu0 %v1488
        %1660 = vmatpush1.bf16.msra.mxu0 %v1487
        %1661 = vmatprep.subr.bf16.mxu0 %v1492
        %1662 = vmatpush1.bf16.msra.mxu0 %v1491
        %1663 = vmatprep.subr.bf16.mxu0 %v1496
        %1664 = vmatpush1.bf16.msra.mxu0 %v1495
        %1665 = vmatprep.subr.bf16.mxu0 %v1500
        %1666 = vmatpush1.bf16.msra.mxu0 %v1499
        %1667 = vmatprep.subr.bf16.mxu0 %v1504
        %1668 = vmatpush1.bf16.msra.mxu0 %v1503
        %1669 = vmatprep.subr.bf16.mxu0 %v1508
        %1670 = vmatpush1.bf16.msra.mxu0 %v1507
        %1671 = vmatprep.subr.bf16.mxu0 %v1512
        %1672 = vmatpush1.bf16.msra.mxu0 %v1511
        %1673 = vmatprep.subr.bf16.mxu0 %v1516
        %1674 = vmatpush1.bf16.msra.mxu0 %v1515
        %1675 = vmatprep.subr.bf16.mxu0 %v1520
        %1676 = vmatpush1.bf16.msra.mxu0 %v1519
        %1677 = vmatprep.subr.bf16.mxu0 %v1524
        %1678 = vmatpush1.bf16.msra.mxu0 %v1523
        %1679 = vmatprep.mubr.bf16.mxu0 %v1636
        %1680 = vmatmul.mubr.bf16.gmra.mrb[0].mxu0 %v1622
        %v1681 = vpop.f32.mrb[0].mxu0
        %v1682 = vadd.f32 0.0, %v1681
        %v1683 = vpop.f32.mrb[0].mxu0
        %v1684 = vadd.f32 0.0, %v1683
        %v1685 = vpop.f32.mrb[0].mxu0
        %v1686 = vpop.f32.mrb[0].mxu0
        %1687 = vdwg.mxu0
        %1688 = vmatprep.subr.bf16.mxu0 %v1528
        %1689 = vmatpush1.bf16.msra.mxu0 %v1527
        %1690 = vmatprep.subr.bf16.mxu0 %v1532
        %1691 = vmatpush1.bf16.msra.mxu0 %v1531
        %1692 = vmatprep.subr.bf16.mxu0 %v1536
        %1693 = vmatpush1.bf16.msra.mxu0 %v1535
        %1694 = vmatprep.subr.bf16.mxu0 %v1540
        %1695 = vmatpush1.bf16.msra.mxu0 %v1539
        %1696 = vmatprep.subr.bf16.mxu0 %v1544
        %1697 = vmatpush1.bf16.msra.mxu0 %v1543
        %1698 = vmatprep.subr.bf16.mxu0 %v1548
        %1699 = vmatpush1.bf16.msra.mxu0 %v1547
        %1700 = vmatprep.subr.bf16.mxu0 %v1552
        %1701 = vmatpush1.bf16.msra.mxu0 %v1551
        %1702 = vmatprep.subr.bf16.mxu0 %v1556
        %1703 = vmatpush1.bf16.msra.mxu0 %v1555
        %1704 = vmatprep.subr.bf16.mxu0 %v1560
        %1705 = vmatpush1.bf16.msra.mxu0 %v1559
        %1706 = vmatprep.subr.bf16.mxu0 %v1564
        %1707 = vmatpush1.bf16.msra.mxu0 %v1563
        %1708 = vmatprep.subr.bf16.mxu0 %v1568
        %1709 = vmatpush1.bf16.msra.mxu0 %v1567
        %1710 = vmatprep.subr.bf16.mxu0 %v1572
        %1711 = vmatpush1.bf16.msra.mxu0 %v1571
        %1712 = vmatprep.subr.bf16.mxu0 %v1576
        %1713 = vmatpush1.bf16.msra.mxu0 %v1575
        %1714 = vmatprep.subr.bf16.mxu0 %v1580
        %1715 = vmatpush1.bf16.msra.mxu0 %v1579
        %1716 = vmatprep.subr.bf16.mxu0 %v1584
        %1717 = vmatpush1.bf16.msra.mxu0 %v1583
        %1718 = vmatprep.subr.bf16.mxu0 %v1588
        %1719 = vmatpush1.bf16.msra.mxu0 %v1587
        %1720 = vmatprep.mubr.bf16.mxu0 %v1638
        %1721 = vmatmul.mubr.bf16.gmra.mrb[0].mxu0 %v1637
        %v1722 = vpop.f32.mrb[0].mxu0
        %v1723 = vadd.f32 %v1682, %v1722
        %v1724 = vpop.f32.mrb[0].mxu0
        %v1725 = vadd.f32 %v1684, %v1724
        %v1726 = vpop.f32.mrb[0].mxu0
        %v1727 = vpop.f32.mrb[0].mxu0
        %1728 = vdwg.mxu0
        %1729 = vmatprep.subr.bf16.mxu0 %v1592
        %1730 = vmatpush1.bf16.msra.mxu0 %v1591
        %1731 = vmatprep.subr.bf16.mxu0 %v1596
        %1732 = vmatpush1.bf16.msra.mxu0 %v1595
        %1733 = vmatprep.subr.bf16.mxu0 0
        %1734 = vmatpush1.bf16.msra.mxu0 0
        %1735 = vmatprep.subr.bf16.mxu0 0
        %1736 = vmatpush1.bf16.msra.mxu0 0
        %1737 = vmatprep.subr.bf16.mxu0 0
        %1738 = vmatpush1.bf16.msra.mxu0 0
        %1739 = vmatprep.subr.bf16.mxu0 0
        %1740 = vmatpush1.bf16.msra.mxu0 0
        %1741 = vmatprep.subr.bf16.mxu0 0
        %1742 = vmatpush1.bf16.msra.mxu0 0
        %1743 = vmatprep.subr.bf16.mxu0 0
        %1744 = vmatpush1.bf16.msra.mxu0 0
        %1745 = vmatprep.subr.bf16.mxu0 0
        %1746 = vmatpush1.bf16.msra.mxu0 0
        %1747 = vmatprep.subr.bf16.mxu0 0
        %1748 = vmatpush1.bf16.msra.mxu0 0
        %1749 = vmatprep.subr.bf16.mxu0 0
        %1750 = vmatpush1.bf16.msra.mxu0 0
        %1751 = vmatprep.subr.bf16.mxu0 0
        %1752 = vmatpush1.bf16.msra.mxu0 0
        %1753 = vmatprep.subr.bf16.mxu0 0
        %1754 = vmatpush1.bf16.msra.mxu0 0
        %1755 = vmatprep.subr.bf16.mxu0 0
        %1756 = vmatpush1.bf16.msra.mxu0 0
        %1757 = vmatprep.subr.bf16.mxu0 0
        %1758 = vmatpush1.bf16.msra.mxu0 0
        %1759 = vmatprep.subr.bf16.mxu0 0
        %1760 = vmatpush1.bf16.msra.mxu0 0
        %1761 = vmatprep.mubr.bf16.mxu0 0
        %1762 = vmatmul.mubr.bf16.gmra.mrb[0].mxu0 %v1645
        %v1763 = vpop.f32.mrb[0].mxu0
        %v1764 = vadd.f32 %v1723, %v1763
        %v1765 = vpop.f32.mrb[0].mxu0
        %v1766 = vadd.f32 %v1725, %v1765
        %v1767 = vpop.f32.mrb[0].mxu0
        %v1768 = vpop.f32.mrb[0].mxu0
        %1769 = vdwg.mxu0
        %1770 = vmatprep.subr.bf16.mxu0 %v1466
        %1771 = vmatpush1.bf16.msra.mxu0 %v1465
        %1772 = vmatprep.subr.bf16.mxu0 %v1470
        %1773 = vmatpush1.bf16.msra.mxu0 %v1469
        %1774 = vmatprep.subr.bf16.mxu0 %v1474
        %1775 = vmatpush1.bf16.msra.mxu0 %v1473
        %1776 = vmatprep.subr.bf16.mxu0 %v1478
        %1777 = vmatpush1.bf16.msra.mxu0 %v1477
        %1778 = vmatprep.subr.bf16.mxu0 %v1482
        %1779 = vmatpush1.bf16.msra.mxu0 %v1481
        %1780 = vmatprep.subr.bf16.mxu0 %v1486
        %1781 = vmatpush1.bf16.msra.mxu0 %v1485
        %1782 = vmatprep.subr.bf16.mxu0 %v1490
        %1783 = vmatpush1.bf16.msra.mxu0 %v1489
        %1784 = vmatprep.subr.bf16.mxu0 %v1494
        %1785 = vmatpush1.bf16.msra.mxu0 %v1493
        %1786 = vmatprep.subr.bf16.mxu0 %v1498
        %1787 = vmatpush1.bf16.msra.mxu0 %v1497
        %1788 = vmatprep.subr.bf16.mxu0 %v1502
        %1789 = vmatpush1.bf16.msra.mxu0 %v1501
        %1790 = vmatprep.subr.bf16.mxu0 %v1506
        %1791 = vmatpush1.bf16.msra.mxu0 %v1505
        %1792 = vmatprep.subr.bf16.mxu0 %v1510
        %1793 = vmatpush1.bf16.msra.mxu0 %v1509
        %1794 = vmatprep.subr.bf16.mxu0 %v1514
        %1795 = vmatpush1.bf16.msra.mxu0 %v1513
        %1796 = vmatprep.subr.bf16.mxu0 %v1518
        %1797 = vmatpush1.bf16.msra.mxu0 %v1517
        %1798 = vmatprep.subr.bf16.mxu0 %v1522
        %1799 = vmatpush1.bf16.msra.mxu0 %v1521
        %1800 = vmatprep.subr.bf16.mxu0 %v1526
        %1801 = vmatpush1.bf16.msra.mxu0 %v1525
        %1802 = vmatprep.mubr.bf16.mxu0 %v1636
        %1803 = vmatmul.mubr.bf16.gmra.mrb[0].mxu0 %v1622
        %v1804 = vpop.f32.mrb[0].mxu0
        %v1805 = vadd.f32 0.0, %v1804
        %v1806 = vpop.f32.mrb[0].mxu0
        %v1807 = vadd.f32 0.0, %v1806
        %v1808 = vpop.f32.mrb[0].mxu0
        %v1809 = vpop.f32.mrb[0].mxu0
        %1810 = vdwg.mxu0
        %1811 = vmatprep.subr.bf16.mxu0 %v1530
        %1812 = vmatpush1.bf16.msra.mxu0 %v1529
        %1813 = vmatprep.subr.bf16.mxu0 %v1534
        %1814 = vmatpush1.bf16.msra.mxu0 %v1533
        %1815 = vmatprep.subr.bf16.mxu0 %v1538
        %1816 = vmatpush1.bf16.msra.mxu0 %v1537
        %1817 = vmatprep.subr.bf16.mxu0 %v1542
        %1818 = vmatpush1.bf16.msra.mxu0 %v1541
        %1819 = vmatprep.subr.bf16.mxu0 %v1546
        %1820 = vmatpush1.bf16.msra.mxu0 %v1545
        %1821 = vmatprep.subr.bf16.mxu0 %v1550
        %1822 = vmatpush1.bf16.msra.mxu0 %v1549
        %1823 = vmatprep.subr.bf16.mxu0 %v1554
        %1824 = vmatpush1.bf16.msra.mxu0 %v1553
        %1825 = vmatprep.subr.bf16.mxu0 %v1558
        %1826 = vmatpush1.bf16.msra.mxu0 %v1557
        %1827 = vmatprep.subr.bf16.mxu0 %v1562
        %1828 = vmatpush1.bf16.msra.mxu0 %v1561
        %1829 = vmatprep.subr.bf16.mxu0 %v1566
        %1830 = vmatpush1.bf16.msra.mxu0 %v1565
        %1831 = vmatprep.subr.bf16.mxu0 %v1570
        %1832 = vmatpush1.bf16.msra.mxu0 %v1569
        %1833 = vmatprep.subr.bf16.mxu0 %v1574
        %1834 = vmatpush1.bf16.msra.mxu0 %v1573
        %1835 = vmatprep.subr.bf16.mxu0 %v1578
        %1836 = vmatpush1.bf16.msra.mxu0 %v1577
        %1837 = vmatprep.subr.bf16.mxu0 %v1582
        %1838 = vmatpush1.bf16.msra.mxu0 %v1581
        %1839 = vmatprep.subr.bf16.mxu0 %v1586
        %1840 = vmatpush1.bf16.msra.mxu0 %v1585
        %1841 = vmatprep.subr.bf16.mxu0 %v1590
        %1842 = vmatpush1.bf16.msra.mxu0 %v1589
        %1843 = vmatprep.mubr.bf16.mxu0 %v1638
        %1844 = vmatmul.mubr.bf16.gmra.mrb[0].mxu0 %v1637
        %v1845 = vpop.f32.mrb[0].mxu0
        %v1846 = vadd.f32 %v1805, %v1845
        %v1847 = vpop.f32.mrb[0].mxu0
        %v1848 = vadd.f32 %v1807, %v1847
        %v1849 = vpop.f32.mrb[0].mxu0
        %v1850 = vpop.f32.mrb[0].mxu0
        %1851 = vdwg.mxu0
        %1852 = vmatprep.subr.bf16.mxu0 %v1594
        %1853 = vmatpush1.bf16.msra.mxu0 %v1593
        %1854 = vmatprep.subr.bf16.mxu0 %v1598
        %1855 = vmatpush1.bf16.msra.mxu0 %v1597
        %1856 = vmatprep.subr.bf16.mxu0 0
        %1857 = vmatpush1.bf16.msra.mxu0 0
        %1858 = vmatprep.subr.bf16.mxu0 0
        %1859 = vmatpush1.bf16.msra.mxu0 0
        %1860 = vmatprep.subr.bf16.mxu0 0
        %1861 = vmatpush1.bf16.msra.mxu0 0
        %1862 = vmatprep.subr.bf16.mxu0 0
        %1863 = vmatpush1.bf16.msra.mxu0 0
        %1864 = vmatprep.subr.bf16.mxu0 0
        %1865 = vmatpush1.bf16.msra.mxu0 0
        %1866 = vmatprep.subr.bf16.mxu0 0
        %1867 = vmatpush1.bf16.msra.mxu0 0
        %1868 = vmatprep.subr.bf16.mxu0 0
        %1869 = vmatpush1.bf16.msra.mxu0 0
        %1870 = vmatprep.subr.bf16.mxu0 0
        %1871 = vmatpush1.bf16.msra.mxu0 0
        %1872 = vmatprep.subr.bf16.mxu0 0
        %1873 = vmatpush1.bf16.msra.mxu0 0
        %1874 = vmatprep.subr.bf16.mxu0 0
        %1875 = vmatpush1.bf16.msra.mxu0 0
        %1876 = vmatprep.subr.bf16.mxu0 0
        %1877 = vmatpush1.bf16.msra.mxu0 0
        %1878 = vmatprep.subr.bf16.mxu0 0
        %1879 = vmatpush1.bf16.msra.mxu0 0
        %1880 = vmatprep.subr.bf16.mxu0 0
        %1881 = vmatpush1.bf16.msra.mxu0 0
        %1882 = vmatprep.subr.bf16.mxu0 0
        %1883 = vmatpush1.bf16.msra.mxu0 0
        %1884 = vmatprep.mubr.bf16.mxu0 0
        %1885 = vmatmul.mubr.bf16.gmra.mrb[0].mxu0 %v1645
        %v1886 = vpop.f32.mrb[0].mxu0
        %v1887 = vadd.f32 %v1846, %v1886
        %v1888 = vpop.f32.mrb[0].mxu0
        %v1889 = vadd.f32 %v1848, %v1888
        %v1890 = vpop.f32.mrb[0].mxu0
        %v1891 = vpop.f32.mrb[0].mxu0
        %1892 = vdwg.mxu0
        %s1893 = scalar_lea.vmem %s326, 1 [#allocation11]
        %v1894 = vld [vmem:[%s1893] ss:$2 sm:$0xf]
        %v1895 = vld [vmem:[%s326] ss:$2 sm:$0xf]
        %v1900 = vcombine.low %v1764, %v1766
        %v1901 = vcombine.low %v1887, %v1889
        %v1903 = vunpack.c.l.s4 1966171168
        %v1904 = vunpack.c.0.s8 %v1903
        %v1905 = vlaneseq
        %v1906 = vshrl.u32 %v1905, 7
        %v1907 = vsub.s32 %v1904, %v1906
        %v1908 = vrot.slane %v1900, %v1907
        %v1910 = vunpack.c.l.s4 1966171168
        %v1911 = vunpack.c.0.s8 %v1910
        %v1912 = vlaneseq
        %v1913 = vshrl.u32 %v1912, 7
        %v1914 = vsub.s32 %v1911, %v1913
        %v1915 = vrot.slane %v1901, %v1914
        %v1916 = vcombine.low %v1908, %v1915
        %v1918 = vunpack.c.l.s4 1966171168
        %v1919 = vunpack.c.0.s8 %v1918
        %v1920 = vlaneseq
        %v1921 = vshrl.u32 %v1920, 7
        %v1922 = vsub.s32 %v1919, %v1921
        %v1923 = vrot.slane %v1916, %v1922
        %v1925 = vmul.f32 %v1895, %v1923
        %v1926 = vadd.f32 %v1894, %v1925
        %v1927 = vlaneseq
        %vm1928 = vcmp.ge.s32.totalorder %v1927, 0
        %vm1929 = vcmp.lt.s32.totalorder %v1927, 512
        %vm1930 = vmand %vm1928, %vm1929
        %1931 = vst.msk [vmem:[%s367] sm:$0xf] %vm1930, %v1926
        %s1932 = sand.u32 %s159, 1
        %s1933 = scalar_lea.sflag [#allocation5], %s1932
        %s1934 = sand.u32 %s159, 1
        %s1935 = smul.addr %s1934, 4
        %s1936 = scalar_lea.vmem [#allocation12], %s1935
        // Predicated region
        $region61: #{tpu_custom_call.1} parent=39 // pred_check
          %p1937 = pneg %p169
        $region62: #{tpu_custom_call.1} parent=39 // pred_check_branch
          %1939 = sbr.rel (%p1937) target = $region64
        $region63: #{tpu_custom_call.1} parent=39 // pred_region
          %s1940 = smul.u32 4, %s26
          %s1942 = ssub.s32 64, 64
          %1943 = vsyncadd %s1933, %s1942
          %s1944 = smul.addr %s1940, 16
          %s1945 = scalar_lea.hbm %s5, %s1944
          %s1947 = sshll.u32 %s1936, 4
          %s1948 = int_to_ptr.vmem [resolvable:$true] %s1947
          %1950 = dma.vmem_to_hbm [thread:$0]  %s1948, 64, %s1945, %s1933
        $region64: #{tpu_custom_call.1} parent=39 // pred_fallthru
          _
      $region40: #{tpu_custom_call.1} parent=5 // pred_fallthru
        _
      %p1951 = scmp.le.s32.totalorder 2, %s21
      // Predicated region
      $region65: #{tpu_custom_call.1} parent=5 // pred_check
        %p1952 = pneg %p1951
      $region66: #{tpu_custom_call.1} parent=5 // pred_check_branch
        %1954 = sbr.rel (%p1952) target = $region68
      $region67: #{tpu_custom_call.1} parent=5 // pred_region
        %s1955 = ssub.s32 %s21, 2
        // Predicated region
        $region69: #{tpu_custom_call.1} parent=67 // pred_check
          %p1956 = pneg %p175
        $region70: #{tpu_custom_call.1} parent=67 // pred_check_branch
          %1958 = sbr.rel (%p1956) target = $region72
        $region71: #{tpu_custom_call.1} parent=67 // pred_region
          %s1959 = sand.u32 %s160, 1
          %s1960 = scalar_lea.sflag [#allocation5], %s1959
          %s1961 = sand.u32 %s160, 1
          %s1962 = smul.addr %s1961, 4
          %s1963 = scalar_lea.vmem [#allocation12], %s1962
          %1964 = dma.done %s1960, 64
        $region72: #{tpu_custom_call.1} parent=67 // pred_fallthru
          _
      $region68: #{tpu_custom_call.1} parent=5 // pred_fallthru
        _
    $region6: #{tpu_custom_call.1} parent=1 // loop_footer
      %s25 = sadd.s32 1, %s21
    $region7: #{tpu_custom_call.1} parent=1 // loop_footer_branch
      %20 = sbr.rel target = $region3
    $region8: #{tpu_custom_call.1} parent=1 // loop_exit
      _
    %1965 = vsyncpa [#allocation4], 1
    %s1966 = scalar_lea.sflag [#allocation4], 1
    %1967 = vsyncpa %s1966, 1
    %1968 = vsyncpa [#allocation7], 1
    %s1969 = scalar_lea.sflag [#allocation7], 1
    %1970 = vsyncpa %s1969, 1
    %1971 = vsyncpa [#allocation10], 1
    %s1972 = scalar_lea.sflag [#allocation10], 1
    %1973 = vsyncpa %s1972, 1
    %1974 = vsyncpa [#allocation5], 1
    %s1975 = scalar_lea.sflag [#allocation5], 1
    %1976 = vsyncpa %s1975, 1

</llo_original>
